<compile_context>
chip_gen: v5e
topology: v5e:2x2
jax: 0.10.0
libtpu: 0.0.40
codegen_flags: <defaults>
</compile_context>

<pallas_src>
import numpy as np
import jax
import jax.numpy as jnp
from jax.experimental import pallas as pl
from jax.experimental.pallas import tpu as pltpu

# lig_feature_dims[0]: cardinalities of the ligand categorical atom features
LIG_CATEGORICAL_DIMS = [119, 4, 12, 12, 10, 6, 6, 2, 2]
LIG_NUM_SCALAR_FEATURES = 0      # lig_feature_dims[1]; unused by forward()

EMB_DIM = 32
LANE = 128
PACK = LANE // EMB_DIM           # 4 atoms packed per 128-lane output row
F = len(LIG_CATEGORICAL_DIMS)    # 9 categorical features
V_TOTAL = sum(LIG_CATEGORICAL_DIMS)   # 173
V_PAD = 256                      # vocab padded to a full 256-lane MXU K pass
BASE = PACK * LANE               # 512-atom packing granule (128 output rows)


def atom_encoder_kernel(xw_ref, sel_ref, lane_ref, thi_ref, tlo_ref, o_ref):
    """Sum-of-embeddings via a multihot matmul, all matmuls on the bf16 MXU path.

    xw_ref:   (tile_r, PACK*F)      int32  packed, globally-offset indices
    sel_ref:  (PACK*F, PACK*V_PAD)  bf16   static 0/1 feature-ownership matrix
    lane_ref: (1, PACK*V_PAD)       f32    lane -> vocab-id constant (l % V_PAD)
    thi_ref:  (PACK*V_PAD, 128)     bf16   block-diag table, high bf16 half
    tlo_ref:  (PACK*V_PAD, 128)     bf16   block-diag table, low bf16 half
    o_ref:    (tile_r, 128)         f32    4 atoms' summed embeddings per row
    """
    # Indices <= 172 and sel in {0,1}: exact in bf16; f32 accumulation keeps
    # `owner` exactly integer-valued so the equality-based multihot is safe.
    idx = xw_ref[...].astype(jnp.bfloat16)                       # (tr, 4F)
    owner = jnp.dot(idx, sel_ref[...],
                    preferred_element_type=jnp.float32)          # (tr, 1024) f32

    multihot = (owner == lane_ref[...]).astype(jnp.bfloat16)     # exact 0/1

    # Sum of F embedding rows per atom; 4 atoms concatenated along lanes.
    # bf16 hi/lo table split recovers ~f32 accuracy with two native bf16 passes.
    acc = jnp.dot(multihot, thi_ref[...], preferred_element_type=jnp.float32)
    acc = acc + jnp.dot(multihot, tlo_ref[...],
                        preferred_element_type=jnp.float32)
    o_ref[...] = acc


def _build_static_params():
    """Per-feature offsets, the wide 0/1 ownership matrix, lane-vocab row."""
    offsets = np.concatenate(
        [[0], np.cumsum(LIG_CATEGORICAL_DIMS)[:-1]]).astype(np.int32)
    sel = np.zeros((F, V_PAD), np.float32)
    for f, d in enumerate(LIG_CATEGORICAL_DIMS):
        sel[f, offsets[f]:offsets[f] + d] = 1.0
    # Block-diagonal over the PACK packed atoms: (PACK*F, PACK*V_PAD).
    sel_wide = np.kron(np.eye(PACK, dtype=np.float32), sel)
    # lane_vocab[0, l] = l % V_PAD, hoisted out of the kernel.
    lane_vocab = (np.arange(PACK * V_PAD) % V_PAD).astype(np.float32)[None, :]
    return offsets, sel_wide, lane_vocab


def _build_table_wide(tables):
    """Stack tables, pad vocab to V_PAD, block-diag over PACK, bf16 hi/lo split."""
    table = jnp.concatenate(tables, axis=0)                      # (V_TOTAL, E)
    table_pad = jnp.pad(table, ((0, V_PAD - V_TOTAL), (0, 0)))   # (V_PAD, E)
    wide = jnp.kron(jnp.eye(PACK, dtype=jnp.float32), table_pad)  # (1024, 128)
    hi = wide.astype(jnp.bfloat16)
    lo = (wide - hi.astype(jnp.float32)).astype(jnp.bfloat16)
    return hi, lo


def atom_encoder(x, offsets, sel_wide, lane_vocab, table_hi, table_lo, *,
                 tile_n=2048):
    """x: [N, F] int32 raw categorical features. Returns [N, EMB_DIM] float32."""
    N, nf = x.shape
    assert nf == F
    tile_n = max(int(tile_n), BASE)

    x_off = x.astype(jnp.int32) + jnp.asarray(offsets)[None, :]

    # Pad atoms only up to the 512-atom packing granule, then pick a tile that
    # (a) is <= the requested size, (b) yields >= 2 grid steps when there is
    # enough work (v7x has 2 TensorCores), and (c) divides the padded count.
    np0 = N + (-N) % BASE
    steps = max(1, pl.cdiv(np0, min(tile_n, np0)))
    if np0 > BASE:
        steps = max(steps, 2)
    tile = pl.cdiv(pl.cdiv(np0, steps), BASE) * BASE
    n_total = steps * tile

    xp = jnp.pad(x_off, ((0, n_total - N), (0, 0)))              # pad rows -> idx 0
    R = n_total // PACK                                          # packed output rows
    tile_r = tile // PACK
    xw = xp.reshape(R, PACK * F)                                 # row-major pack

    flops = (2 * R * (PACK * F) * (PACK * V_PAD)
             + 2 * (2 * R * (PACK * V_PAD) * LANE))
    bytes_accessed = (xw.size * 4 + sel_wide.size * 2 + lane_vocab.size * 4
                      + table_hi.size * 2 + table_lo.size * 2 + R * LANE * 4)

    out_wide = pl.pallas_call(
        atom_encoder_kernel,
        out_shape=jax.ShapeDtypeStruct((R, LANE), jnp.float32),
        grid_spec=pltpu.PrefetchScalarGridSpec(
            num_scalar_prefetch=0,
            grid=(steps,),
            in_specs=[
                pl.BlockSpec((tile_r, PACK * F), lambda i: (i, 0)),
                pl.BlockSpec((PACK * F, PACK * V_PAD), lambda i: (0, 0)),
                pl.BlockSpec((1, PACK * V_PAD), lambda i: (0, 0)),
                pl.BlockSpec((PACK * V_PAD, LANE), lambda i: (0, 0)),
                pl.BlockSpec((PACK * V_PAD, LANE), lambda i: (0, 0)),
            ],
            out_specs=pl.BlockSpec((tile_r, LANE), lambda i: (i, 0)),
        ),
        compiler_params=pltpu.CompilerParams(
            dimension_semantics=("parallel",),
            vmem_limit_bytes=32 * 1024 * 1024),
        cost_estimate=pl.CostEstimate(
            flops=flops, transcendentals=0, bytes_accessed=bytes_accessed),
    )(xw, sel_wide, lane_vocab, table_hi, table_lo)

    # Contiguous unpack: (R, 128) -> (n_total, 32); pure layout plumbing in JAX.
    return out_wide.reshape(n_total, EMB_DIM)[:N]


def _xavier_uniform(key, shape):
    fan_in, fan_out = shape
    bound = float(np.sqrt(6.0 / (fan_in + fan_out)))
    return jax.random.uniform(key, shape, minval=-bound, maxval=bound,
                              dtype=jnp.float32)


if __name__ == "__main__":
    key = jax.random.PRNGKey(0)
    N = 16  # number of atoms (small demo size)

    keys = jax.random.split(key, F + 1)

    # Deterministic xavier_uniform init of each nn.Embedding(dim, EMB_DIM).
    tables = [_xavier_uniform(keys[i], (dim, EMB_DIM))
              for i, dim in enumerate(LIG_CATEGORICAL_DIMS)]

    offsets_np, sel_wide_np, lane_vocab_np = _build_static_params()
    sel_wide = jnp.asarray(sel_wide_np, dtype=jnp.bfloat16)      # exact 0/1
    lane_vocab = jnp.asarray(lane_vocab_np, dtype=jnp.float32)
    table_hi, table_lo = _build_table_wide(tables)

    # Deterministic categorical input x: [N, F], each column in [0, dim_i).
    x_cols = []
    for i, dim in enumerate(LIG_CATEGORICAL_DIMS):
        kx = jax.random.fold_in(keys[F], i)
        x_cols.append(jax.random.randint(kx, (N,), 0, dim, dtype=jnp.int32))
    x = jnp.stack(x_cols, axis=1)                                # [N, F]

    out = atom_encoder(x, offsets_np, sel_wide, lane_vocab, table_hi, table_lo)
    out = jax.block_until_ready(out)

    # Pure-JAX f32 reference: sum of per-feature embedding lookups.
    ref = jnp.zeros((N, EMB_DIM), jnp.float32)
    for i in range(F):
        ref = ref + tables[i][x[:, i]]

    assert out.shape == (N, EMB_DIM)
    assert jnp.allclose(out, ref, atol=1e-4, rtol=1e-4)
    print("KERNEL_OK")
</pallas_src>

<mosaic_0001>
module attributes {stable_mosaic.version = 11 : i64} {
  func.func @atom_encoder_kernel(%arg0: i32, %arg1: memref<128x36xi32, #tpu.memory_space<vmem>>, %arg2: memref<36x1024xbf16, #tpu.memory_space<vmem>>, %arg3: memref<1x1024xf32, #tpu.memory_space<vmem>>, %arg4: memref<1024x128xbf16, #tpu.memory_space<vmem>>, %arg5: memref<1024x128xbf16, #tpu.memory_space<vmem>>, %arg6: memref<128x128xf32, #tpu.memory_space<vmem>>) attributes {dimension_semantics = [#tpu.dimension_semantics<parallel>], iteration_bounds = array<i64: 1>, scalar_prefetch = 0 : i64, scratch_operands = 0 : i64, tpu.core_type = #tpu.core_type<tc>, window_params = [{transform_indices = @transform_0, window_bounds = array<i64: 128, 36>}, {pipeline_mode = #tpu.pipeline_mode<synchronous>, transform_indices = @transform_1, window_bounds = array<i64: 36, 1024>}, {pipeline_mode = #tpu.pipeline_mode<synchronous>, transform_indices = @transform_2, window_bounds = array<i64: 1, 1024>}, {pipeline_mode = #tpu.pipeline_mode<synchronous>, transform_indices = @transform_3, window_bounds = array<i64: 1024, 128>}, {pipeline_mode = #tpu.pipeline_mode<synchronous>, transform_indices = @transform_4, window_bounds = array<i64: 1024, 128>}, {transform_indices = @transform_5, window_bounds = array<i64: 128, 128>}]} {
    %c0 = arith.constant 0 : index
    %c0_0 = arith.constant 0 : index
    %0 = vector.load %arg1[%c0, %c0_0] : memref<128x36xi32, #tpu.memory_space<vmem>>, vector<128x36xi32>
    %1 = arith.sitofp %0 : vector<128x36xi32> to vector<128x36xbf16>
    %c0_1 = arith.constant 0 : index
    %c0_2 = arith.constant 0 : index
    %2 = vector.load %arg2[%c0_1, %c0_2] : memref<36x1024xbf16, #tpu.memory_space<vmem>>, vector<36x1024xbf16>
    %cst = arith.constant dense<0.000000e+00> : vector<128x1024xf32>
    %3 = tpu.matmul %1, %2, %cst {dimension_numbers = #tpu.dot_dimension_numbers<[1], [0], [0], [1], [0, 0, 1, 1], [], []>} : vector<128x36xbf16>, vector<36x1024xbf16>, vector<128x1024xf32> -> vector<128x1024xf32>
    %c0_3 = arith.constant 0 : index
    %c0_4 = arith.constant 0 : index
    %4 = vector.load %arg3[%c0_3, %c0_4] : memref<1x1024xf32, #tpu.memory_space<vmem>>, vector<1x1024xf32>
    %5 = vector.broadcast %4 : vector<1x1024xf32> to vector<128x1024xf32>
    %6 = arith.cmpf oeq, %3, %5 : vector<128x1024xf32>
    %7 = arith.extui %6 : vector<128x1024xi1> to vector<128x1024xi32>
    %8 = arith.sitofp %7 : vector<128x1024xi32> to vector<128x1024xf32>
    %9 = arith.truncf %8 : vector<128x1024xf32> to vector<128x1024xbf16>
    %c0_5 = arith.constant 0 : index
    %c0_6 = arith.constant 0 : index
    %10 = vector.load %arg4[%c0_5, %c0_6] : memref<1024x128xbf16, #tpu.memory_space<vmem>>, vector<1024x128xbf16>
    %cst_7 = arith.constant dense<0.000000e+00> : vector<128x128xf32>
    %11 = tpu.matmul %9, %10, %cst_7 {dimension_numbers = #tpu.dot_dimension_numbers<[1], [0], [0], [1], [0, 0, 1, 1], [], []>} : vector<128x1024xbf16>, vector<1024x128xbf16>, vector<128x128xf32> -> vector<128x128xf32>
    %c0_8 = arith.constant 0 : index
    %c0_9 = arith.constant 0 : index
    %12 = vector.load %arg5[%c0_8, %c0_9] : memref<1024x128xbf16, #tpu.memory_space<vmem>>, vector<1024x128xbf16>
    %cst_10 = arith.constant dense<0.000000e+00> : vector<128x128xf32>
    %13 = tpu.matmul %9, %12, %cst_10 {dimension_numbers = #tpu.dot_dimension_numbers<[1], [0], [0], [1], [0, 0, 1, 1], [], []>} : vector<128x1024xbf16>, vector<1024x128xbf16>, vector<128x128xf32> -> vector<128x128xf32>
    %14 = arith.addf %11, %13 : vector<128x128xf32>
    %c0_11 = arith.constant 0 : index
    %c0_12 = arith.constant 0 : index
    %15 = vector.load %arg6[%c0_11, %c0_12] : memref<128x128xf32, #tpu.memory_space<vmem>>, vector<128x128xf32>
    tpu.vector_store %arg6[%c0_11, %c0_12], %14 {strides = array<i32>} : memref<128x128xf32, #tpu.memory_space<vmem>>, vector<128x128xf32>,
    return
  }
  func.func @transform_0(%arg0: i32) -> (i32, i32) {
    %c0_i32 = arith.constant 0 : i32
    %c0_i32_0 = arith.constant 0 : i32
    return %arg0, %c0_i32 : i32, i32
  }
  func.func @transform_1(%arg0: i32) -> (i32, i32) {
    %c0_i32 = arith.constant 0 : i32
    %c0_i32_0 = arith.constant 0 : i32
    %c0_i32_1 = arith.constant 0 : i32
    return %c0_i32, %c0_i32_0 : i32, i32
  }
  func.func @transform_2(%arg0: i32) -> (i32, i32) {
    %c0_i32 = arith.constant 0 : i32
    %c0_i32_0 = arith.constant 0 : i32
    %c0_i32_1 = arith.constant 0 : i32
    return %c0_i32, %c0_i32_0 : i32, i32
  }
  func.func @transform_3(%arg0: i32) -> (i32, i32) {
    %c0_i32 = arith.constant 0 : i32
    %c0_i32_0 = arith.constant 0 : i32
    %c0_i32_1 = arith.constant 0 : i32
    return %c0_i32, %c0_i32_0 : i32, i32
  }
  func.func @transform_4(%arg0: i32) -> (i32, i32) {
    %c0_i32 = arith.constant 0 : i32
    %c0_i32_0 = arith.constant 0 : i32
    %c0_i32_1 = arith.constant 0 : i32
    return %c0_i32, %c0_i32_0 : i32, i32
  }
  func.func @transform_5(%arg0: i32) -> (i32, i32) {
    %c0_i32 = arith.constant 0 : i32
    %c0_i32_0 = arith.constant 0 : i32
    return %arg0, %c0_i32 : i32, i32
  }
}

</mosaic_0001>

<llo_original>
// kernel: tpu_custom_call.1
$region0: #{tpu_custom_call.1}
  #allocation0 [shape = 'u32[]', space=smem, size = 0x4, offset = 0x4, fixed_abs, tag = 'smem constant byte address 0x4 - core index']
  #allocation1 [shape = 'u32[72,128]{1,0:T(1,128)}', space=vmem, size = 0x9000, scoped, tag = 'internal scratch']
  %s0 = inlined_call_operand.vmem [shape: s32[128,36], index: 0, kind: input, shape index: {}]
  %s1 = inlined_call_operand.vmem [shape: bf16[36,1024], index: 1, kind: input, shape index: {}]
  %s2 = inlined_call_operand.vmem [shape: f32[1,1024], index: 2, kind: input, shape index: {}]
  %s3 = inlined_call_operand.hbm [shape: bf16[1024,128], index: 3, kind: input, shape index: {}]
  %s4 = inlined_call_operand.hbm [shape: bf16[1024,128], index: 4, kind: input, shape index: {}]
  %s5 = inlined_call_operand.hbm [shape: f32[128,128], index: 5, kind: output, shape index: {}]
  %s6 = sld [smem:[#allocation0]]
  $region38: #{tpu_custom_call.1} parent=0
    _
  %s8 = ssub.s32 1, %s6
  %s9 = scalar_select 0, %s8, %s6
  $region1: #{tpu_custom_call.1} parent=0
    #allocation2 [shape = 'u8[262144]{0}', space=vmem, size = 0x40000, scoped, tag = 'input window, operand 3, single buffered']
    #allocation3 [shape = 's32[1]{0}', space=sflag, size = 0x4, scoped, tag = 'scoped memory for tpu_custom_call.1']
    #allocation4 [shape = 's32[1]{0}', space=sflag, size = 0x4, scoped, tag = 'scoped memory for tpu_custom_call.1']
    #allocation5 [shape = 'u8[262144]{0}', space=vmem, size = 0x40000, scoped, tag = 'input window, operand 4, single buffered']
    #allocation6 [shape = 's32[1]{0}', space=sflag, size = 0x4, scoped, tag = 'scoped memory for tpu_custom_call.1']
    #allocation7 [shape = 'u8[65536]{0}', space=vmem, size = 0x10000, scoped, tag = 'output window, operand 0, single buffered']
    %10 = vsyncpa [#allocation3], 0
    %11 = vsyncpa [#allocation6], 0
    %12 = vsyncpa [#allocation4], 0
    // Predicated region
    $region2: #{tpu_custom_call.1} parent=1 // pred_check
      _
    $region3: #{tpu_custom_call.1} parent=1 // pred_check_branch
      %14 = sbr.rel (0) target = $region5
    $region4: #{tpu_custom_call.1} parent=1 // pred_region
      _
    $region5: #{tpu_custom_call.1} parent=1 // pred_fallthru
      _
    // Predicated region
    $region6: #{tpu_custom_call.1} parent=1 // pred_check
      _
    $region7: #{tpu_custom_call.1} parent=1 // pred_check_branch
      %16 = sbr.rel (0) target = $region9
    $region8: #{tpu_custom_call.1} parent=1 // pred_region
      _
    $region9: #{tpu_custom_call.1} parent=1 // pred_fallthru
      _
    // Predicated region
    $region10: #{tpu_custom_call.1} parent=1 // pred_check
      _
    $region11: #{tpu_custom_call.1} parent=1 // pred_check_branch
      %18 = sbr.rel (0) target = $region13
    $region12: #{tpu_custom_call.1} parent=1 // pred_region
      _
    $region13: #{tpu_custom_call.1} parent=1 // pred_fallthru
      _
    // Predicated region
    $region14: #{tpu_custom_call.1} parent=1 // pred_check
      _
    $region15: #{tpu_custom_call.1} parent=1 // pred_check_branch
      %20 = sbr.rel (0) target = $region17
    $region16: #{tpu_custom_call.1} parent=1 // pred_region
      %22 = vsyncadd [#allocation3], 0
      %s23 = sshll.u32 %s3, 4
      %s24 = int_to_ptr.hbm [resolvable:$true] %s23
      %s25 = sshll.u32 [#allocation2], 4
      %s26 = int_to_ptr.vmem [resolvable:$true] %s25
      %31 = dma.hbm_to_vmem [thread:$0]  %s24, 8192, %s26, [#allocation3], 64, 64, 4
    $region17: #{tpu_custom_call.1} parent=1 // pred_fallthru
      _
    // Predicated region
    $region18: #{tpu_custom_call.1} parent=1 // pred_check
      _
    $region19: #{tpu_custom_call.1} parent=1 // pred_check_branch
      %33 = sbr.rel (0) target = $region21
    $region20: #{tpu_custom_call.1} parent=1 // pred_region
      %35 = vsyncadd [#allocation6], 0
      %s36 = sshll.u32 %s4, 4
      %s37 = int_to_ptr.hbm [resolvable:$true] %s36
      %s38 = sshll.u32 [#allocation5], 4
      %s39 = int_to_ptr.vmem [resolvable:$true] %s38
      %44 = dma.hbm_to_vmem [thread:$0]  %s37, 8192, %s39, [#allocation6], 64, 64, 4
    $region21: #{tpu_custom_call.1} parent=1 // pred_fallthru
      _
    // Predicated region
    $region22: #{tpu_custom_call.1} parent=1 // pred_check
      _
    $region23: #{tpu_custom_call.1} parent=1 // pred_check_branch
      %46 = sbr.rel (0) target = $region25
    $region24: #{tpu_custom_call.1} parent=1 // pred_region
      %48 = dma.done [#allocation3], 8192
    $region25: #{tpu_custom_call.1} parent=1 // pred_fallthru
      _
    // Predicated region
    $region26: #{tpu_custom_call.1} parent=1 // pred_check
      _
    $region27: #{tpu_custom_call.1} parent=1 // pred_check_branch
      %50 = sbr.rel (0) target = $region29
    $region28: #{tpu_custom_call.1} parent=1 // pred_region
      %52 = dma.done [#allocation6], 8192
    $region29: #{tpu_custom_call.1} parent=1 // pred_fallthru
      _
    %v54 = vld [vmem:[%s0] sm:$0xff]
    %v55 = vld [vmem:[%s0 + $0x8] sm:$0xff]
    %v56 = vld [vmem:[%s0 + $0x10] sm:$0xff]
    %v57 = vld [vmem:[%s0 + $0x18] sm:$0xff]
    %v58 = vld [vmem:[%s0 + $0x20] sm:$0xff]
    %v59 = vld [vmem:[%s0 + $0x28] sm:$0xff]
    %v60 = vld [vmem:[%s0 + $0x30] sm:$0xff]
    %v61 = vld [vmem:[%s0 + $0x38] sm:$0xff]
    %v62 = vld [vmem:[%s0 + $0x40] sm:$0xff]
    %v63 = vld [vmem:[%s0 + $0x48] sm:$0xff]
    %v64 = vld [vmem:[%s0 + $0x50] sm:$0xff]
    %v65 = vld [vmem:[%s0 + $0x58] sm:$0xff]
    %v66 = vld [vmem:[%s0 + $0x60] sm:$0xff]
    %v67 = vld [vmem:[%s0 + $0x68] sm:$0xff]
    %v68 = vld [vmem:[%s0 + $0x70] sm:$0xff]
    %v69 = vld [vmem:[%s0 + $0x78] sm:$0xff]
    %v70 = vcvt.s32.f32 %v54
    %v71 = vcvt.s32.f32 %v55
    %v72 = vcvt.s32.f32 %v56
    %v73 = vcvt.s32.f32 %v57
    %v74 = vcvt.s32.f32 %v58
    %v75 = vcvt.s32.f32 %v59
    %v76 = vcvt.s32.f32 %v60
    %v77 = vcvt.s32.f32 %v61
    %v78 = vcvt.s32.f32 %v62
    %v79 = vcvt.s32.f32 %v63
    %v80 = vcvt.s32.f32 %v64
    %v81 = vcvt.s32.f32 %v65
    %v82 = vcvt.s32.f32 %v66
    %v83 = vcvt.s32.f32 %v67
    %v84 = vcvt.s32.f32 %v68
    %v85 = vcvt.s32.f32 %v69
    %v86 = vpack.c.bf16 %v71, %v70
    %v87 = vpack.c.bf16 %v73, %v72
    %v88 = vpack.c.bf16 %v75, %v74
    %v89 = vpack.c.bf16 %v77, %v76
    %v90 = vpack.c.bf16 %v79, %v78
    %v91 = vpack.c.bf16 %v81, %v80
    %v92 = vpack.c.bf16 %v83, %v82
    %v93 = vpack.c.bf16 %v85, %v84
    %v94 = vld [vmem:[%s1] sm:$0xff]
    %v95 = vld [vmem:[%s1 + $0x8] sm:$0xff]
    %v96 = vld [vmem:[%s1 + $0x10] sm:$0xff]
    %v97 = vld [vmem:[%s1 + $0x18] sm:$0xff]
    %v98 = vld [vmem:[%s1 + $0x20] sm:$0xff]
    %v99 = vld [vmem:[%s1 + $0x28] sm:$0xff]
    %v100 = vld [vmem:[%s1 + $0x30] sm:$0xff]
    %v101 = vld [vmem:[%s1 + $0x38] sm:$0xff]
    %v102 = vld [vmem:[%s1 + $0x40] sm:$0xff]
    %v103 = vld [vmem:[%s1 + $0x48] sm:$0xff]
    %v104 = vld [vmem:[%s1 + $0x50] sm:$0xff]
    %v105 = vld [vmem:[%s1 + $0x58] sm:$0xff]
    %v106 = vld [vmem:[%s1 + $0x60] sm:$0xff]
    %v107 = vld [vmem:[%s1 + $0x68] sm:$0xff]
    %v108 = vld [vmem:[%s1 + $0x70] sm:$0xff]
    %v109 = vld [vmem:[%s1 + $0x78] sm:$0xff]
    %v110 = vld [vmem:[%s1 + $0x80] sm:$0x33]
    %v111 = vld [vmem:[%s1 + $0x88] sm:$0x33]
    %v112 = vld [vmem:[%s1 + $0x90] sm:$0x33]
    %v113 = vld [vmem:[%s1 + $0x98] sm:$0x33]
    %v134 = vunpack.c.l.b16 %v94
    %v135 = vunpack.c.h.b16 %v94
    %v136 = vunpack.c.l.b16 %v95
    %v137 = vunpack.c.h.b16 %v95
    %v138 = vunpack.c.l.b16 %v96
    %v139 = vunpack.c.h.b16 %v96
    %v140 = vunpack.c.l.b16 %v97
    %v141 = vunpack.c.h.b16 %v97
    %v142 = vunpack.c.l.b16 %v98
    %v143 = vunpack.c.h.b16 %v98
    %v144 = vunpack.c.l.b16 %v99
    %v145 = vunpack.c.h.b16 %v99
    %v146 = vunpack.c.l.b16 %v100
    %v147 = vunpack.c.h.b16 %v100
    %v148 = vunpack.c.l.b16 %v101
    %v149 = vunpack.c.h.b16 %v101
    %v150 = vunpack.c.l.b16 %v102
    %v151 = vunpack.c.h.b16 %v102
    %v152 = vunpack.c.l.b16 %v103
    %v153 = vunpack.c.h.b16 %v103
    %v154 = vunpack.c.l.b16 %v104
    %v155 = vunpack.c.h.b16 %v104
    %v156 = vunpack.c.l.b16 %v105
    %v157 = vunpack.c.h.b16 %v105
    %v158 = vunpack.c.l.b16 %v106
    %v159 = vunpack.c.h.b16 %v106
    %v160 = vunpack.c.l.b16 %v107
    %v161 = vunpack.c.h.b16 %v107
    %v162 = vunpack.c.l.b16 %v108
    %v163 = vunpack.c.h.b16 %v108
    %v164 = vunpack.c.l.b16 %v109
    %v165 = vunpack.c.h.b16 %v109
    %v166 = vunpack.c.l.b16 %v110
    %v167 = vunpack.c.h.b16 %v110
    %v168 = vunpack.c.l.b16 %v111
    %v169 = vunpack.c.h.b16 %v111
    %v170 = vunpack.c.l.b16 %v112
    %v171 = vunpack.c.h.b16 %v112
    %v172 = vunpack.c.l.b16 %v113
    %v173 = vunpack.c.h.b16 %v113
    %v174 = vpack.c.b16 %v142, %v134
    %v175 = vpack.c.b16 %v143, %v135
    %v176 = vpack.c.b16 %v144, %v136
    %v177 = vpack.c.b16 %v145, %v137
    %v178 = vpack.c.b16 %v146, %v138
    %v179 = vpack.c.b16 %v147, %v139
    %v180 = vpack.c.b16 %v148, %v140
    %v181 = vpack.c.b16 %v149, %v141
    %v182 = vpack.c.b16 %v158, %v150
    %v183 = vpack.c.b16 %v159, %v151
    %v184 = vpack.c.b16 %v160, %v152
    %v185 = vpack.c.b16 %v161, %v153
    %v186 = vpack.c.b16 %v162, %v154
    %v187 = vpack.c.b16 %v163, %v155
    %v188 = vpack.c.b16 %v164, %v156
    %v189 = vpack.c.b16 %v165, %v157
    %v190 = vpack.c.b16 %v166, %v166
    %v191 = vpack.c.b16 %v167, %v167
    %v192 = vpack.c.b16 %v168, %v168
    %v193 = vpack.c.b16 %v169, %v169
    %v194 = vpack.c.b16 %v170, %v170
    %v195 = vpack.c.b16 %v171, %v171
    %v196 = vpack.c.b16 %v172, %v172
    %v197 = vpack.c.b16 %v173, %v173
    %vm214 = vcmask 293888
    %v216 = vsel %vm214, %v86, 0
    %v219 = vsel %vm214, %v87, 0
    %v222 = vsel %vm214, %v88, 0
    %v225 = vsel %vm214, %v89, 0
    %v228 = vsel %vm214, %v90, 0
    %v231 = vsel %vm214, %v91, 0
    %v234 = vsel %vm214, %v92, 0
    %v237 = vsel %vm214, %v93, 0
    %vm239 = vcmask 1041408
    %v241 = vsel %vm239, %v190, 0
    %v244 = vsel %vm239, %v191, 0
    %v247 = vsel %vm239, %v192, 0
    %v250 = vsel %vm239, %v193, 0
    %v253 = vsel %vm239, %v194, 0
    %v256 = vsel %vm239, %v195, 0
    %v259 = vsel %vm239, %v196, 0
    %v262 = vsel %vm239, %v197, 0
    %264 = vmatpush.bf16.msra.mxu0 0
    %265 = vmatpush.bf16.msra.mxu0 0
    %266 = vmatpush.bf16.msra.mxu0 0
    %267 = vmatpush.bf16.msra.mxu0 0
    %268 = vmatpush.bf16.msra.mxu0 0
    %269 = vmatpush.bf16.msra.mxu0 %v241
    %270 = vmatpush.bf16.msra.mxu0 %v182
    %271 = vmatpush.bf16.msra.mxu0 %v174
    %272 = vmatmul.bf16.gmra.mxu0 %v216
    %v273 = vpop.f32.mrf.mxu0
    %v274 = vadd.f32 0.0, %v273
    %v275 = vpop.f32.mrf.mxu0
    %v276 = vadd.f32 0.0, %v275
    %277 = vmatmul.bf16.gmra.mxu0 %v219
    %v278 = vpop.f32.mrf.mxu0
    %v279 = vadd.f32 0.0, %v278
    %v280 = vpop.f32.mrf.mxu0
    %v281 = vadd.f32 0.0, %v280
    %282 = vmatmul.bf16.gmra.mxu0 %v222
    %v283 = vpop.f32.mrf.mxu0
    %v284 = vadd.f32 0.0, %v283
    %v285 = vpop.f32.mrf.mxu0
    %v286 = vadd.f32 0.0, %v285
    %287 = vmatmul.bf16.gmra.mxu0 %v225
    %v288 = vpop.f32.mrf.mxu0
    %v289 = vadd.f32 0.0, %v288
    %v290 = vpop.f32.mrf.mxu0
    %v291 = vadd.f32 0.0, %v290
    %292 = vmatmul.bf16.gmra.mxu0 %v228
    %v293 = vpop.f32.mrf.mxu0
    %v294 = vadd.f32 0.0, %v293
    %v295 = vpop.f32.mrf.mxu0
    %v296 = vadd.f32 0.0, %v295
    %297 = vmatmul.bf16.gmra.mxu0 %v231
    %v298 = vpop.f32.mrf.mxu0
    %v299 = vadd.f32 0.0, %v298
    %v300 = vpop.f32.mrf.mxu0
    %v301 = vadd.f32 0.0, %v300
    %302 = vmatmul.bf16.gmra.mxu0 %v234
    %v303 = vpop.f32.mrf.mxu0
    %v304 = vadd.f32 0.0, %v303
    %v305 = vpop.f32.mrf.mxu0
    %v306 = vadd.f32 0.0, %v305
    %307 = vmatmul.bf16.gmra.mxu0 %v237
    %v308 = vpop.f32.mrf.mxu0
    %v309 = vadd.f32 0.0, %v308
    %v310 = vpop.f32.mrf.mxu0
    %v311 = vadd.f32 0.0, %v310
    %312 = vdwg.mxu0
    %313 = vmatpush.bf16.msra.mxu0 0
    %314 = vmatpush.bf16.msra.mxu0 0
    %315 = vmatpush.bf16.msra.mxu0 0
    %316 = vmatpush.bf16.msra.mxu0 0
    %317 = vmatpush.bf16.msra.mxu0 0
    %318 = vmatpush.bf16.msra.mxu0 %v244
    %319 = vmatpush.bf16.msra.mxu0 %v183
    %320 = vmatpush.bf16.msra.mxu0 %v175
    %321 = vmatmul.bf16.gmra.mxu0 %v216
    %v322 = vpop.f32.mrf.mxu0
    %v323 = vadd.f32 0.0, %v322
    %v324 = vpop.f32.mrf.mxu0
    %v325 = vadd.f32 0.0, %v324
    %326 = vmatmul.bf16.gmra.mxu0 %v219
    %v327 = vpop.f32.mrf.mxu0
    %v328 = vadd.f32 0.0, %v327
    %v329 = vpop.f32.mrf.mxu0
    %v330 = vadd.f32 0.0, %v329
    %331 = vmatmul.bf16.gmra.mxu0 %v222
    %v332 = vpop.f32.mrf.mxu0
    %v333 = vadd.f32 0.0, %v332
    %v334 = vpop.f32.mrf.mxu0
    %v335 = vadd.f32 0.0, %v334
    %336 = vmatmul.bf16.gmra.mxu0 %v225
    %v337 = vpop.f32.mrf.mxu0
    %v338 = vadd.f32 0.0, %v337
    %v339 = vpop.f32.mrf.mxu0
    %v340 = vadd.f32 0.0, %v339
    %341 = vmatmul.bf16.gmra.mxu0 %v228
    %v342 = vpop.f32.mrf.mxu0
    %v343 = vadd.f32 0.0, %v342
    %v344 = vpop.f32.mrf.mxu0
    %v345 = vadd.f32 0.0, %v344
    %346 = vmatmul.bf16.gmra.mxu0 %v231
    %v347 = vpop.f32.mrf.mxu0
    %v348 = vadd.f32 0.0, %v347
    %v349 = vpop.f32.mrf.mxu0
    %v350 = vadd.f32 0.0, %v349
    %351 = vmatmul.bf16.gmra.mxu0 %v234
    %v352 = vpop.f32.mrf.mxu0
    %v353 = vadd.f32 0.0, %v352
    %v354 = vpop.f32.mrf.mxu0
    %v355 = vadd.f32 0.0, %v354
    %356 = vmatmul.bf16.gmra.mxu0 %v237
    %v357 = vpop.f32.mrf.mxu0
    %v358 = vadd.f32 0.0, %v357
    %v359 = vpop.f32.mrf.mxu0
    %v360 = vadd.f32 0.0, %v359
    %361 = vdwg.mxu0
    %362 = vmatpush.bf16.msra.mxu0 0
    %363 = vmatpush.bf16.msra.mxu0 0
    %364 = vmatpush.bf16.msra.mxu0 0
    %365 = vmatpush.bf16.msra.mxu0 0
    %366 = vmatpush.bf16.msra.mxu0 0
    %367 = vmatpush.bf16.msra.mxu0 %v247
    %368 = vmatpush.bf16.msra.mxu0 %v184
    %369 = vmatpush.bf16.msra.mxu0 %v176
    %370 = vmatmul.bf16.gmra.mxu0 %v216
    %v371 = vpop.f32.mrf.mxu0
    %v372 = vadd.f32 0.0, %v371
    %v373 = vpop.f32.mrf.mxu0
    %v374 = vadd.f32 0.0, %v373
    %375 = vmatmul.bf16.gmra.mxu0 %v219
    %v376 = vpop.f32.mrf.mxu0
    %v377 = vadd.f32 0.0, %v376
    %v378 = vpop.f32.mrf.mxu0
    %v379 = vadd.f32 0.0, %v378
    %380 = vmatmul.bf16.gmra.mxu0 %v222
    %v381 = vpop.f32.mrf.mxu0
    %v382 = vadd.f32 0.0, %v381
    %v383 = vpop.f32.mrf.mxu0
    %v384 = vadd.f32 0.0, %v383
    %385 = vmatmul.bf16.gmra.mxu0 %v225
    %v386 = vpop.f32.mrf.mxu0
    %v387 = vadd.f32 0.0, %v386
    %v388 = vpop.f32.mrf.mxu0
    %v389 = vadd.f32 0.0, %v388
    %390 = vmatmul.bf16.gmra.mxu0 %v228
    %v391 = vpop.f32.mrf.mxu0
    %v392 = vadd.f32 0.0, %v391
    %v393 = vpop.f32.mrf.mxu0
    %v394 = vadd.f32 0.0, %v393
    %395 = vmatmul.bf16.gmra.mxu0 %v231
    %v396 = vpop.f32.mrf.mxu0
    %v397 = vadd.f32 0.0, %v396
    %v398 = vpop.f32.mrf.mxu0
    %v399 = vadd.f32 0.0, %v398
    %400 = vmatmul.bf16.gmra.mxu0 %v234
    %v401 = vpop.f32.mrf.mxu0
    %v402 = vadd.f32 0.0, %v401
    %v403 = vpop.f32.mrf.mxu0
    %v404 = vadd.f32 0.0, %v403
    %405 = vmatmul.bf16.gmra.mxu0 %v237
    %v406 = vpop.f32.mrf.mxu0
    %v407 = vadd.f32 0.0, %v406
    %v408 = vpop.f32.mrf.mxu0
    %v409 = vadd.f32 0.0, %v408
    %410 = vdwg.mxu0
    %411 = vmatpush.bf16.msra.mxu0 0
    %412 = vmatpush.bf16.msra.mxu0 0
    %413 = vmatpush.bf16.msra.mxu0 0
    %414 = vmatpush.bf16.msra.mxu0 0
    %415 = vmatpush.bf16.msra.mxu0 0
    %416 = vmatpush.bf16.msra.mxu0 %v250
    %417 = vmatpush.bf16.msra.mxu0 %v185
    %418 = vmatpush.bf16.msra.mxu0 %v177
    %419 = vmatmul.bf16.gmra.mxu0 %v216
    %v420 = vpop.f32.mrf.mxu0
    %v421 = vadd.f32 0.0, %v420
    %v422 = vpop.f32.mrf.mxu0
    %v423 = vadd.f32 0.0, %v422
    %424 = vmatmul.bf16.gmra.mxu0 %v219
    %v425 = vpop.f32.mrf.mxu0
    %v426 = vadd.f32 0.0, %v425
    %v427 = vpop.f32.mrf.mxu0
    %v428 = vadd.f32 0.0, %v427
    %429 = vmatmul.bf16.gmra.mxu0 %v222
    %v430 = vpop.f32.mrf.mxu0
    %v431 = vadd.f32 0.0, %v430
    %v432 = vpop.f32.mrf.mxu0
    %v433 = vadd.f32 0.0, %v432
    %434 = vmatmul.bf16.gmra.mxu0 %v225
    %v435 = vpop.f32.mrf.mxu0
    %v436 = vadd.f32 0.0, %v435
    %v437 = vpop.f32.mrf.mxu0
    %v438 = vadd.f32 0.0, %v437
    %439 = vmatmul.bf16.gmra.mxu0 %v228
    %v440 = vpop.f32.mrf.mxu0
    %v441 = vadd.f32 0.0, %v440
    %v442 = vpop.f32.mrf.mxu0
    %v443 = vadd.f32 0.0, %v442
    %444 = vmatmul.bf16.gmra.mxu0 %v231
    %v445 = vpop.f32.mrf.mxu0
    %v446 = vadd.f32 0.0, %v445
    %v447 = vpop.f32.mrf.mxu0
    %v448 = vadd.f32 0.0, %v447
    %449 = vmatmul.bf16.gmra.mxu0 %v234
    %v450 = vpop.f32.mrf.mxu0
    %v451 = vadd.f32 0.0, %v450
    %v452 = vpop.f32.mrf.mxu0
    %v453 = vadd.f32 0.0, %v452
    %454 = vmatmul.bf16.gmra.mxu0 %v237
    %v455 = vpop.f32.mrf.mxu0
    %v456 = vadd.f32 0.0, %v455
    %v457 = vpop.f32.mrf.mxu0
    %v458 = vadd.f32 0.0, %v457
    %459 = vdwg.mxu0
    %460 = vmatpush.bf16.msra.mxu0 0
    %461 = vmatpush.bf16.msra.mxu0 0
    %462 = vmatpush.bf16.msra.mxu0 0
    %463 = vmatpush.bf16.msra.mxu0 0
    %464 = vmatpush.bf16.msra.mxu0 0
    %465 = vmatpush.bf16.msra.mxu0 %v253
    %466 = vmatpush.bf16.msra.mxu0 %v186
    %467 = vmatpush.bf16.msra.mxu0 %v178
    %468 = vmatmul.bf16.gmra.mxu0 %v216
    %v469 = vpop.f32.mrf.mxu0
    %v470 = vadd.f32 0.0, %v469
    %v471 = vpop.f32.mrf.mxu0
    %v472 = vadd.f32 0.0, %v471
    %473 = vmatmul.bf16.gmra.mxu0 %v219
    %v474 = vpop.f32.mrf.mxu0
    %v475 = vadd.f32 0.0, %v474
    %v476 = vpop.f32.mrf.mxu0
    %v477 = vadd.f32 0.0, %v476
    %478 = vmatmul.bf16.gmra.mxu0 %v222
    %v479 = vpop.f32.mrf.mxu0
    %v480 = vadd.f32 0.0, %v479
    %v481 = vpop.f32.mrf.mxu0
    %v482 = vadd.f32 0.0, %v481
    %483 = vmatmul.bf16.gmra.mxu0 %v225
    %v484 = vpop.f32.mrf.mxu0
    %v485 = vadd.f32 0.0, %v484
    %v486 = vpop.f32.mrf.mxu0
    %v487 = vadd.f32 0.0, %v486
    %488 = vmatmul.bf16.gmra.mxu0 %v228
    %v489 = vpop.f32.mrf.mxu0
    %v490 = vadd.f32 0.0, %v489
    %v491 = vpop.f32.mrf.mxu0
    %v492 = vadd.f32 0.0, %v491
    %493 = vmatmul.bf16.gmra.mxu0 %v231
    %v494 = vpop.f32.mrf.mxu0
    %v495 = vadd.f32 0.0, %v494
    %v496 = vpop.f32.mrf.mxu0
    %v497 = vadd.f32 0.0, %v496
    %498 = vmatmul.bf16.gmra.mxu0 %v234
    %v499 = vpop.f32.mrf.mxu0
    %v500 = vadd.f32 0.0, %v499
    %v501 = vpop.f32.mrf.mxu0
    %v502 = vadd.f32 0.0, %v501
    %503 = vmatmul.bf16.gmra.mxu0 %v237
    %v504 = vpop.f32.mrf.mxu0
    %v505 = vadd.f32 0.0, %v504
    %v506 = vpop.f32.mrf.mxu0
    %v507 = vadd.f32 0.0, %v506
    %508 = vdwg.mxu0
    %509 = vmatpush.bf16.msra.mxu0 0
    %510 = vmatpush.bf16.msra.mxu0 0
    %511 = vmatpush.bf16.msra.mxu0 0
    %512 = vmatpush.bf16.msra.mxu0 0
    %513 = vmatpush.bf16.msra.mxu0 0
    %514 = vmatpush.bf16.msra.mxu0 %v256
    %515 = vmatpush.bf16.msra.mxu0 %v187
    %516 = vmatpush.bf16.msra.mxu0 %v179
    %517 = vmatmul.bf16.gmra.mxu0 %v216
    %v518 = vpop.f32.mrf.mxu0
    %v519 = vadd.f32 0.0, %v518
    %v520 = vpop.f32.mrf.mxu0
    %v521 = vadd.f32 0.0, %v520
    %522 = vmatmul.bf16.gmra.mxu0 %v219
    %v523 = vpop.f32.mrf.mxu0
    %v524 = vadd.f32 0.0, %v523
    %v525 = vpop.f32.mrf.mxu0
    %v526 = vadd.f32 0.0, %v525
    %527 = vmatmul.bf16.gmra.mxu0 %v222
    %v528 = vpop.f32.mrf.mxu0
    %v529 = vadd.f32 0.0, %v528
    %v530 = vpop.f32.mrf.mxu0
    %v531 = vadd.f32 0.0, %v530
    %532 = vmatmul.bf16.gmra.mxu0 %v225
    %v533 = vpop.f32.mrf.mxu0
    %v534 = vadd.f32 0.0, %v533
    %v535 = vpop.f32.mrf.mxu0
    %v536 = vadd.f32 0.0, %v535
    %537 = vmatmul.bf16.gmra.mxu0 %v228
    %v538 = vpop.f32.mrf.mxu0
    %v539 = vadd.f32 0.0, %v538
    %v540 = vpop.f32.mrf.mxu0
    %v541 = vadd.f32 0.0, %v540
    %542 = vmatmul.bf16.gmra.mxu0 %v231
    %v543 = vpop.f32.mrf.mxu0
    %v544 = vadd.f32 0.0, %v543
    %v545 = vpop.f32.mrf.mxu0
    %v546 = vadd.f32 0.0, %v545
    %547 = vmatmul.bf16.gmra.mxu0 %v234
    %v548 = vpop.f32.mrf.mxu0
    %v549 = vadd.f32 0.0, %v548
    %v550 = vpop.f32.mrf.mxu0
    %v551 = vadd.f32 0.0, %v550
    %552 = vmatmul.bf16.gmra.mxu0 %v237
    %v553 = vpop.f32.mrf.mxu0
    %v554 = vadd.f32 0.0, %v553
    %v555 = vpop.f32.mrf.mxu0
    %v556 = vadd.f32 0.0, %v555
    %557 = vdwg.mxu0
    %558 = vmatpush.bf16.msra.mxu0 0
    %559 = vmatpush.bf16.msra.mxu0 0
    %560 = vmatpush.bf16.msra.mxu0 0
    %561 = vmatpush.bf16.msra.mxu0 0
    %562 = vmatpush.bf16.msra.mxu0 0
    %563 = vmatpush.bf16.msra.mxu0 %v259
    %564 = vmatpush.bf16.msra.mxu0 %v188
    %565 = vmatpush.bf16.msra.mxu0 %v180
    %566 = vmatmul.bf16.gmra.mxu0 %v216
    %v567 = vpop.f32.mrf.mxu0
    %v568 = vadd.f32 0.0, %v567
    %v569 = vpop.f32.mrf.mxu0
    %v570 = vadd.f32 0.0, %v569
    %571 = vmatmul.bf16.gmra.mxu0 %v219
    %v572 = vpop.f32.mrf.mxu0
    %v573 = vadd.f32 0.0, %v572
    %v574 = vpop.f32.mrf.mxu0
    %v575 = vadd.f32 0.0, %v574
    %576 = vmatmul.bf16.gmra.mxu0 %v222
    %v577 = vpop.f32.mrf.mxu0
    %v578 = vadd.f32 0.0, %v577
    %v579 = vpop.f32.mrf.mxu0
    %v580 = vadd.f32 0.0, %v579
    %581 = vmatmul.bf16.gmra.mxu0 %v225
    %v582 = vpop.f32.mrf.mxu0
    %v583 = vadd.f32 0.0, %v582
    %v584 = vpop.f32.mrf.mxu0
    %v585 = vadd.f32 0.0, %v584
    %586 = vmatmul.bf16.gmra.mxu0 %v228
    %v587 = vpop.f32.mrf.mxu0
    %v588 = vadd.f32 0.0, %v587
    %v589 = vpop.f32.mrf.mxu0
    %v590 = vadd.f32 0.0, %v589
    %591 = vmatmul.bf16.gmra.mxu0 %v231
    %v592 = vpop.f32.mrf.mxu0
    %v593 = vadd.f32 0.0, %v592
    %v594 = vpop.f32.mrf.mxu0
    %v595 = vadd.f32 0.0, %v594
    %596 = vmatmul.bf16.gmra.mxu0 %v234
    %v597 = vpop.f32.mrf.mxu0
    %v598 = vadd.f32 0.0, %v597
    %v599 = vpop.f32.mrf.mxu0
    %v600 = vadd.f32 0.0, %v599
    %601 = vmatmul.bf16.gmra.mxu0 %v237
    %v602 = vpop.f32.mrf.mxu0
    %v603 = vadd.f32 0.0, %v602
    %v604 = vpop.f32.mrf.mxu0
    %v605 = vadd.f32 0.0, %v604
    %606 = vdwg.mxu0
    %607 = vmatpush.bf16.msra.mxu0 0
    %608 = vmatpush.bf16.msra.mxu0 0
    %609 = vmatpush.bf16.msra.mxu0 0
    %610 = vmatpush.bf16.msra.mxu0 0
    %611 = vmatpush.bf16.msra.mxu0 0
    %612 = vmatpush.bf16.msra.mxu0 %v262
    %613 = vmatpush.bf16.msra.mxu0 %v189
    %614 = vmatpush.bf16.msra.mxu0 %v181
    %615 = vmatmul.bf16.gmra.mxu0 %v216
    %v616 = vpop.f32.mrf.mxu0
    %v617 = vadd.f32 0.0, %v616
    %v618 = vpop.f32.mrf.mxu0
    %v619 = vadd.f32 0.0, %v618
    %620 = vmatmul.bf16.gmra.mxu0 %v219
    %v621 = vpop.f32.mrf.mxu0
    %v622 = vadd.f32 0.0, %v621
    %v623 = vpop.f32.mrf.mxu0
    %v624 = vadd.f32 0.0, %v623
    %625 = vmatmul.bf16.gmra.mxu0 %v222
    %v626 = vpop.f32.mrf.mxu0
    %v627 = vadd.f32 0.0, %v626
    %v628 = vpop.f32.mrf.mxu0
    %v629 = vadd.f32 0.0, %v628
    %630 = vmatmul.bf16.gmra.mxu0 %v225
    %v631 = vpop.f32.mrf.mxu0
    %v632 = vadd.f32 0.0, %v631
    %v633 = vpop.f32.mrf.mxu0
    %v634 = vadd.f32 0.0, %v633
    %635 = vmatmul.bf16.gmra.mxu0 %v228
    %v636 = vpop.f32.mrf.mxu0
    %v637 = vadd.f32 0.0, %v636
    %v638 = vpop.f32.mrf.mxu0
    %v639 = vadd.f32 0.0, %v638
    %640 = vmatmul.bf16.gmra.mxu0 %v231
    %v641 = vpop.f32.mrf.mxu0
    %v642 = vadd.f32 0.0, %v641
    %v643 = vpop.f32.mrf.mxu0
    %v644 = vadd.f32 0.0, %v643
    %645 = vmatmul.bf16.gmra.mxu0 %v234
    %v646 = vpop.f32.mrf.mxu0
    %v647 = vadd.f32 0.0, %v646
    %v648 = vpop.f32.mrf.mxu0
    %v649 = vadd.f32 0.0, %v648
    %650 = vmatmul.bf16.gmra.mxu0 %v237
    %v651 = vpop.f32.mrf.mxu0
    %v652 = vadd.f32 0.0, %v651
    %v653 = vpop.f32.mrf.mxu0
    %v654 = vadd.f32 0.0, %v653
    %655 = vdwg.mxu0
    %v656 = vld [vmem:[%s2] sm:$0xff]
    %v658 = vperm.slane %v656, 0
    %v659 = vperm.slane %v656, 1
    %v660 = vperm.slane %v656, 2
    %v661 = vperm.slane %v656, 3
    %v662 = vperm.slane %v656, 4
    %v663 = vperm.slane %v656, 5
    %v664 = vperm.slane %v656, 6
    %v665 = vperm.slane %v656, 7
    %vm674 = vcmp.eq.f32.partialorder %v274, %v658
    %vm675 = vcmp.eq.f32.partialorder %v323, %v659
    %vm676 = vcmp.eq.f32.partialorder %v372, %v660
    %vm677 = vcmp.eq.f32.partialorder %v421, %v661
    %vm678 = vcmp.eq.f32.partialorder %v470, %v662
    %vm679 = vcmp.eq.f32.partialorder %v519, %v663
    %vm680 = vcmp.eq.f32.partialorder %v568, %v664
    %vm681 = vcmp.eq.f32.partialorder %v617, %v665
    %vm682 = vcmp.eq.f32.partialorder %v276, %v658
    %vm683 = vcmp.eq.f32.partialorder %v325, %v659
    %vm684 = vcmp.eq.f32.partialorder %v374, %v660
    %vm685 = vcmp.eq.f32.partialorder %v423, %v661
    %vm686 = vcmp.eq.f32.partialorder %v472, %v662
    %vm687 = vcmp.eq.f32.partialorder %v521, %v663
    %vm688 = vcmp.eq.f32.partialorder %v570, %v664
    %vm689 = vcmp.eq.f32.partialorder %v619, %v665
    %vm690 = vcmp.eq.f32.partialorder %v279, %v658
    %vm691 = vcmp.eq.f32.partialorder %v328, %v659
    %vm692 = vcmp.eq.f32.partialorder %v377, %v660
    %vm693 = vcmp.eq.f32.partialorder %v426, %v661
    %vm694 = vcmp.eq.f32.partialorder %v475, %v662
    %vm695 = vcmp.eq.f32.partialorder %v524, %v663
    %vm696 = vcmp.eq.f32.partialorder %v573, %v664
    %vm697 = vcmp.eq.f32.partialorder %v622, %v665
    %vm698 = vcmp.eq.f32.partialorder %v281, %v658
    %vm699 = vcmp.eq.f32.partialorder %v330, %v659
    %vm700 = vcmp.eq.f32.partialorder %v379, %v660
    %vm701 = vcmp.eq.f32.partialorder %v428, %v661
    %vm702 = vcmp.eq.f32.partialorder %v477, %v662
    %vm703 = vcmp.eq.f32.partialorder %v526, %v663
    %vm704 = vcmp.eq.f32.partialorder %v575, %v664
    %vm705 = vcmp.eq.f32.partialorder %v624, %v665
    %vm706 = vcmp.eq.f32.partialorder %v284, %v658
    %vm707 = vcmp.eq.f32.partialorder %v333, %v659
    %vm708 = vcmp.eq.f32.partialorder %v382, %v660
    %vm709 = vcmp.eq.f32.partialorder %v431, %v661
    %vm710 = vcmp.eq.f32.partialorder %v480, %v662
    %vm711 = vcmp.eq.f32.partialorder %v529, %v663
    %vm712 = vcmp.eq.f32.partialorder %v578, %v664
    %vm713 = vcmp.eq.f32.partialorder %v627, %v665
    %vm714 = vcmp.eq.f32.partialorder %v286, %v658
    %vm715 = vcmp.eq.f32.partialorder %v335, %v659
    %vm716 = vcmp.eq.f32.partialorder %v384, %v660
    %vm717 = vcmp.eq.f32.partialorder %v433, %v661
    %vm718 = vcmp.eq.f32.partialorder %v482, %v662
    %vm719 = vcmp.eq.f32.partialorder %v531, %v663
    %vm720 = vcmp.eq.f32.partialorder %v580, %v664
    %vm721 = vcmp.eq.f32.partialorder %v629, %v665
    %vm722 = vcmp.eq.f32.partialorder %v289, %v658
    %vm723 = vcmp.eq.f32.partialorder %v338, %v659
    %vm724 = vcmp.eq.f32.partialorder %v387, %v660
    %vm725 = vcmp.eq.f32.partialorder %v436, %v661
    %vm726 = vcmp.eq.f32.partialorder %v485, %v662
    %vm727 = vcmp.eq.f32.partialorder %v534, %v663
    %vm728 = vcmp.eq.f32.partialorder %v583, %v664
    %vm729 = vcmp.eq.f32.partialorder %v632, %v665
    %vm730 = vcmp.eq.f32.partialorder %v291, %v658
    %vm731 = vcmp.eq.f32.partialorder %v340, %v659
    %vm732 = vcmp.eq.f32.partialorder %v389, %v660
    %vm733 = vcmp.eq.f32.partialorder %v438, %v661
    %vm734 = vcmp.eq.f32.partialorder %v487, %v662
    %vm735 = vcmp.eq.f32.partialorder %v536, %v663
    %vm736 = vcmp.eq.f32.partialorder %v585, %v664
    %vm737 = vcmp.eq.f32.partialorder %v634, %v665
    %vm738 = vcmp.eq.f32.partialorder %v294, %v658
    %vm739 = vcmp.eq.f32.partialorder %v343, %v659
    %vm740 = vcmp.eq.f32.partialorder %v392, %v660
    %vm741 = vcmp.eq.f32.partialorder %v441, %v661
    %vm742 = vcmp.eq.f32.partialorder %v490, %v662
    %vm743 = vcmp.eq.f32.partialorder %v539, %v663
    %vm744 = vcmp.eq.f32.partialorder %v588, %v664
    %vm745 = vcmp.eq.f32.partialorder %v637, %v665
    %vm746 = vcmp.eq.f32.partialorder %v296, %v658
    %vm747 = vcmp.eq.f32.partialorder %v345, %v659
    %vm748 = vcmp.eq.f32.partialorder %v394, %v660
    %vm749 = vcmp.eq.f32.partialorder %v443, %v661
    %vm750 = vcmp.eq.f32.partialorder %v492, %v662
    %vm751 = vcmp.eq.f32.partialorder %v541, %v663
    %vm752 = vcmp.eq.f32.partialorder %v590, %v664
    %vm753 = vcmp.eq.f32.partialorder %v639, %v665
    %vm754 = vcmp.eq.f32.partialorder %v299, %v658
    %vm755 = vcmp.eq.f32.partialorder %v348, %v659
    %vm756 = vcmp.eq.f32.partialorder %v397, %v660
    %vm757 = vcmp.eq.f32.partialorder %v446, %v661
    %vm758 = vcmp.eq.f32.partialorder %v495, %v662
    %vm759 = vcmp.eq.f32.partialorder %v544, %v663
    %vm760 = vcmp.eq.f32.partialorder %v593, %v664
    %vm761 = vcmp.eq.f32.partialorder %v642, %v665
    %vm762 = vcmp.eq.f32.partialorder %v301, %v658
    %vm763 = vcmp.eq.f32.partialorder %v350, %v659
    %vm764 = vcmp.eq.f32.partialorder %v399, %v660
    %vm765 = vcmp.eq.f32.partialorder %v448, %v661
    %vm766 = vcmp.eq.f32.partialorder %v497, %v662
    %vm767 = vcmp.eq.f32.partialorder %v546, %v663
    %vm768 = vcmp.eq.f32.partialorder %v595, %v664
    %vm769 = vcmp.eq.f32.partialorder %v644, %v665
    %vm770 = vcmp.eq.f32.partialorder %v304, %v658
    %vm771 = vcmp.eq.f32.partialorder %v353, %v659
    %vm772 = vcmp.eq.f32.partialorder %v402, %v660
    %vm773 = vcmp.eq.f32.partialorder %v451, %v661
    %vm774 = vcmp.eq.f32.partialorder %v500, %v662
    %vm775 = vcmp.eq.f32.partialorder %v549, %v663
    %vm776 = vcmp.eq.f32.partialorder %v598, %v664
    %vm777 = vcmp.eq.f32.partialorder %v647, %v665
    %vm778 = vcmp.eq.f32.partialorder %v306, %v658
    %vm779 = vcmp.eq.f32.partialorder %v355, %v659
    %vm780 = vcmp.eq.f32.partialorder %v404, %v660
    %vm781 = vcmp.eq.f32.partialorder %v453, %v661
    %vm782 = vcmp.eq.f32.partialorder %v502, %v662
    %vm783 = vcmp.eq.f32.partialorder %v551, %v663
    %vm784 = vcmp.eq.f32.partialorder %v600, %v664
    %vm785 = vcmp.eq.f32.partialorder %v649, %v665
    %vm786 = vcmp.eq.f32.partialorder %v309, %v658
    %vm787 = vcmp.eq.f32.partialorder %v358, %v659
    %vm788 = vcmp.eq.f32.partialorder %v407, %v660
    %vm789 = vcmp.eq.f32.partialorder %v456, %v661
    %vm790 = vcmp.eq.f32.partialorder %v505, %v662
    %vm791 = vcmp.eq.f32.partialorder %v554, %v663
    %vm792 = vcmp.eq.f32.partialorder %v603, %v664
    %vm793 = vcmp.eq.f32.partialorder %v652, %v665
    %vm794 = vcmp.eq.f32.partialorder %v311, %v658
    %vm795 = vcmp.eq.f32.partialorder %v360, %v659
    %vm796 = vcmp.eq.f32.partialorder %v409, %v660
    %vm797 = vcmp.eq.f32.partialorder %v458, %v661
    %vm798 = vcmp.eq.f32.partialorder %v507, %v662
    %vm799 = vcmp.eq.f32.partialorder %v556, %v663
    %vm800 = vcmp.eq.f32.partialorder %v605, %v664
    %vm801 = vcmp.eq.f32.partialorder %v654, %v665
    %v802 = vsel %vm674, 1, 0
    %v803 = vsel %vm675, 1, 0
    %v804 = vsel %vm676, 1, 0
    %v805 = vsel %vm677, 1, 0
    %v806 = vsel %vm678, 1, 0
    %v807 = vsel %vm679, 1, 0
    %v808 = vsel %vm680, 1, 0
    %v809 = vsel %vm681, 1, 0
    %v810 = vsel %vm682, 1, 0
    %v811 = vsel %vm683, 1, 0
    %v812 = vsel %vm684, 1, 0
    %v813 = vsel %vm685, 1, 0
    %v814 = vsel %vm686, 1, 0
    %v815 = vsel %vm687, 1, 0
    %v816 = vsel %vm688, 1, 0
    %v817 = vsel %vm689, 1, 0
    %v818 = vsel %vm690, 1, 0
    %v819 = vsel %vm691, 1, 0
    %v820 = vsel %vm692, 1, 0
    %v821 = vsel %vm693, 1, 0
    %v822 = vsel %vm694, 1, 0
    %v823 = vsel %vm695, 1, 0
    %v824 = vsel %vm696, 1, 0
    %v825 = vsel %vm697, 1, 0
    %v826 = vsel %vm698, 1, 0
    %v827 = vsel %vm699, 1, 0
    %v828 = vsel %vm700, 1, 0
    %v829 = vsel %vm701, 1, 0
    %v830 = vsel %vm702, 1, 0
    %v831 = vsel %vm703, 1, 0
    %v832 = vsel %vm704, 1, 0
    %v833 = vsel %vm705, 1, 0
    %v834 = vsel %vm706, 1, 0
    %v835 = vsel %vm707, 1, 0
    %v836 = vsel %vm708, 1, 0
    %v837 = vsel %vm709, 1, 0
    %v838 = vsel %vm710, 1, 0
    %v839 = vsel %vm711, 1, 0
    %v840 = vsel %vm712, 1, 0
    %v841 = vsel %vm713, 1, 0
    %v842 = vsel %vm714, 1, 0
    %v843 = vsel %vm715, 1, 0
    %v844 = vsel %vm716, 1, 0
    %v845 = vsel %vm717, 1, 0
    %v846 = vsel %vm718, 1, 0
    %v847 = vsel %vm719, 1, 0
    %v848 = vsel %vm720, 1, 0
    %v849 = vsel %vm721, 1, 0
    %v850 = vsel %vm722, 1, 0
    %v851 = vsel %vm723, 1, 0
    %v852 = vsel %vm724, 1, 0
    %v853 = vsel %vm725, 1, 0
    %v854 = vsel %vm726, 1, 0
    %v855 = vsel %vm727, 1, 0
    %v856 = vsel %vm728, 1, 0
    %v857 = vsel %vm729, 1, 0
    %v858 = vsel %vm730, 1, 0
    %v859 = vsel %vm731, 1, 0
    %v860 = vsel %vm732, 1, 0
    %v861 = vsel %vm733, 1, 0
    %v862 = vsel %vm734, 1, 0
    %v863 = vsel %vm735, 1, 0
    %v864 = vsel %vm736, 1, 0
    %v865 = vsel %vm737, 1, 0
    %v866 = vsel %vm738, 1, 0
    %v867 = vsel %vm739, 1, 0
    %v868 = vsel %vm740, 1, 0
    %v869 = vsel %vm741, 1, 0
    %v870 = vsel %vm742, 1, 0
    %v871 = vsel %vm743, 1, 0
    %v872 = vsel %vm744, 1, 0
    %v873 = vsel %vm745, 1, 0
    %v874 = vsel %vm746, 1, 0
    %v875 = vsel %vm747, 1, 0
    %v876 = vsel %vm748, 1, 0
    %v877 = vsel %vm749, 1, 0
    %v878 = vsel %vm750, 1, 0
    %v879 = vsel %vm751, 1, 0
    %v880 = vsel %vm752, 1, 0
    %v881 = vsel %vm753, 1, 0
    %v882 = vsel %vm754, 1, 0
    %v883 = vsel %vm755, 1, 0
    %v884 = vsel %vm756, 1, 0
    %v885 = vsel %vm757, 1, 0
    %v886 = vsel %vm758, 1, 0
    %v887 = vsel %vm759, 1, 0
    %v888 = vsel %vm760, 1, 0
    %v889 = vsel %vm761, 1, 0
    %v890 = vsel %vm762, 1, 0
    %v891 = vsel %vm763, 1, 0
    %v892 = vsel %vm764, 1, 0
    %v893 = vsel %vm765, 1, 0
    %v894 = vsel %vm766, 1, 0
    %v895 = vsel %vm767, 1, 0
    %v896 = vsel %vm768, 1, 0
    %v897 = vsel %vm769, 1, 0
    %v898 = vsel %vm770, 1, 0
    %v899 = vsel %vm771, 1, 0
    %v900 = vsel %vm772, 1, 0
    %v901 = vsel %vm773, 1, 0
    %v902 = vsel %vm774, 1, 0
    %v903 = vsel %vm775, 1, 0
    %v904 = vsel %vm776, 1, 0
    %v905 = vsel %vm777, 1, 0
    %v906 = vsel %vm778, 1, 0
    %v907 = vsel %vm779, 1, 0
    %v908 = vsel %vm780, 1, 0
    %v909 = vsel %vm781, 1, 0
    %v910 = vsel %vm782, 1, 0
    %v911 = vsel %vm783, 1, 0
    %v912 = vsel %vm784, 1, 0
    %v913 = vsel %vm785, 1, 0
    %v914 = vsel %vm786, 1, 0
    %v915 = vsel %vm787, 1, 0
    %v916 = vsel %vm788, 1, 0
    %v917 = vsel %vm789, 1, 0
    %v918 = vsel %vm790, 1, 0
    %v919 = vsel %vm791, 1, 0
    %v920 = vsel %vm792, 1, 0
    %v921 = vsel %vm793, 1, 0
    %v922 = vsel %vm794, 1, 0
    %v923 = vsel %vm795, 1, 0
    %v924 = vsel %vm796, 1, 0
    %v925 = vsel %vm797, 1, 0
    %v926 = vsel %vm798, 1, 0
    %v927 = vsel %vm799, 1, 0
    %v928 = vsel %vm800, 1, 0
    %v929 = vsel %vm801, 1, 0
    %v930 = vcvt.s32.f32 %v802
    %v931 = vcvt.s32.f32 %v803
    %v932 = vcvt.s32.f32 %v804
    %v933 = vcvt.s32.f32 %v805
    %v934 = vcvt.s32.f32 %v806
    %v935 = vcvt.s32.f32 %v807
    %v936 = vcvt.s32.f32 %v808
    %v937 = vcvt.s32.f32 %v809
    %v938 = vcvt.s32.f32 %v810
    %v939 = vcvt.s32.f32 %v811
    %v940 = vcvt.s32.f32 %v812
    %v941 = vcvt.s32.f32 %v813
    %v942 = vcvt.s32.f32 %v814
    %v943 = vcvt.s32.f32 %v815
    %v944 = vcvt.s32.f32 %v816
    %v945 = vcvt.s32.f32 %v817
    %v946 = vcvt.s32.f32 %v818
    %v947 = vcvt.s32.f32 %v819
    %v948 = vcvt.s32.f32 %v820
    %v949 = vcvt.s32.f32 %v821
    %v950 = vcvt.s32.f32 %v822
    %v951 = vcvt.s32.f32 %v823
    %v952 = vcvt.s32.f32 %v824
    %v953 = vcvt.s32.f32 %v825
    %v954 = vcvt.s32.f32 %v826
    %v955 = vcvt.s32.f32 %v827
    %v956 = vcvt.s32.f32 %v828
    %v957 = vcvt.s32.f32 %v829
    %v958 = vcvt.s32.f32 %v830
    %v959 = vcvt.s32.f32 %v831
    %v960 = vcvt.s32.f32 %v832
    %v961 = vcvt.s32.f32 %v833
    %v962 = vcvt.s32.f32 %v834
    %v963 = vcvt.s32.f32 %v835
    %v964 = vcvt.s32.f32 %v836
    %v965 = vcvt.s32.f32 %v837
    %v966 = vcvt.s32.f32 %v838
    %v967 = vcvt.s32.f32 %v839
    %v968 = vcvt.s32.f32 %v840
    %v969 = vcvt.s32.f32 %v841
    %v970 = vcvt.s32.f32 %v842
    %v971 = vcvt.s32.f32 %v843
    %v972 = vcvt.s32.f32 %v844
    %v973 = vcvt.s32.f32 %v845
    %v974 = vcvt.s32.f32 %v846
    %v975 = vcvt.s32.f32 %v847
    %v976 = vcvt.s32.f32 %v848
    %v977 = vcvt.s32.f32 %v849
    %v978 = vcvt.s32.f32 %v850
    %v979 = vcvt.s32.f32 %v851
    %v980 = vcvt.s32.f32 %v852
    %v981 = vcvt.s32.f32 %v853
    %v982 = vcvt.s32.f32 %v854
    %v983 = vcvt.s32.f32 %v855
    %v984 = vcvt.s32.f32 %v856
    %v985 = vcvt.s32.f32 %v857
    %v986 = vcvt.s32.f32 %v858
    %v987 = vcvt.s32.f32 %v859
    %v988 = vcvt.s32.f32 %v860
    %v989 = vcvt.s32.f32 %v861
    %v990 = vcvt.s32.f32 %v862
    %v991 = vcvt.s32.f32 %v863
    %v992 = vcvt.s32.f32 %v864
    %v993 = vcvt.s32.f32 %v865
    %v994 = vcvt.s32.f32 %v866
    %v995 = vcvt.s32.f32 %v867
    %v996 = vcvt.s32.f32 %v868
    %v997 = vcvt.s32.f32 %v869
    %v998 = vcvt.s32.f32 %v870
    %v999 = vcvt.s32.f32 %v871
    %v1000 = vcvt.s32.f32 %v872
    %v1001 = vcvt.s32.f32 %v873
    %v1002 = vcvt.s32.f32 %v874
    %v1003 = vcvt.s32.f32 %v875
    %v1004 = vcvt.s32.f32 %v876
    %v1005 = vcvt.s32.f32 %v877
    %v1006 = vcvt.s32.f32 %v878
    %v1007 = vcvt.s32.f32 %v879
    %v1008 = vcvt.s32.f32 %v880
    %v1009 = vcvt.s32.f32 %v881
    %v1010 = vcvt.s32.f32 %v882
    %v1011 = vcvt.s32.f32 %v883
    %v1012 = vcvt.s32.f32 %v884
    %v1013 = vcvt.s32.f32 %v885
    %v1014 = vcvt.s32.f32 %v886
    %v1015 = vcvt.s32.f32 %v887
    %v1016 = vcvt.s32.f32 %v888
    %v1017 = vcvt.s32.f32 %v889
    %v1018 = vcvt.s32.f32 %v890
    %v1019 = vcvt.s32.f32 %v891
    %v1020 = vcvt.s32.f32 %v892
    %v1021 = vcvt.s32.f32 %v893
    %v1022 = vcvt.s32.f32 %v894
    %v1023 = vcvt.s32.f32 %v895
    %v1024 = vcvt.s32.f32 %v896
    %v1025 = vcvt.s32.f32 %v897
    %v1026 = vcvt.s32.f32 %v898
    %v1027 = vcvt.s32.f32 %v899
    %v1028 = vcvt.s32.f32 %v900
    %v1029 = vcvt.s32.f32 %v901
    %v1030 = vcvt.s32.f32 %v902
    %v1031 = vcvt.s32.f32 %v903
    %v1032 = vcvt.s32.f32 %v904
    %v1033 = vcvt.s32.f32 %v905
    %v1034 = vcvt.s32.f32 %v906
    %v1035 = vcvt.s32.f32 %v907
    %v1036 = vcvt.s32.f32 %v908
    %v1037 = vcvt.s32.f32 %v909
    %v1038 = vcvt.s32.f32 %v910
    %v1039 = vcvt.s32.f32 %v911
    %v1040 = vcvt.s32.f32 %v912
    %v1041 = vcvt.s32.f32 %v913
    %v1042 = vcvt.s32.f32 %v914
    %v1043 = vcvt.s32.f32 %v915
    %v1044 = vcvt.s32.f32 %v916
    %v1045 = vcvt.s32.f32 %v917
    %v1046 = vcvt.s32.f32 %v918
    %v1047 = vcvt.s32.f32 %v919
    %v1048 = vcvt.s32.f32 %v920
    %v1049 = vcvt.s32.f32 %v921
    %v1050 = vcvt.s32.f32 %v922
    %v1051 = vcvt.s32.f32 %v923
    %v1052 = vcvt.s32.f32 %v924
    %v1053 = vcvt.s32.f32 %v925
    %v1054 = vcvt.s32.f32 %v926
    %v1055 = vcvt.s32.f32 %v927
    %v1056 = vcvt.s32.f32 %v928
    %v1057 = vcvt.s32.f32 %v929
    %v1058 = vpack.c.bf16 %v938, %v930
    %v1059 = vpack.c.bf16 %v939, %v931
    %v1060 = vpack.c.bf16 %v940, %v932
    %v1061 = vpack.c.bf16 %v941, %v933
    %v1062 = vpack.c.bf16 %v942, %v934
    %v1063 = vpack.c.bf16 %v943, %v935
    %v1064 = vpack.c.bf16 %v944, %v936
    %v1065 = vpack.c.bf16 %v945, %v937
    %v1066 = vpack.c.bf16 %v954, %v946
    %v1067 = vpack.c.bf16 %v955, %v947
    %v1068 = vpack.c.bf16 %v956, %v948
    %v1069 = vpack.c.bf16 %v957, %v949
    %v1070 = vpack.c.bf16 %v958, %v950
    %v1071 = vpack.c.bf16 %v959, %v951
    %v1072 = vpack.c.bf16 %v960, %v952
    %v1073 = vpack.c.bf16 %v961, %v953
    %v1074 = vpack.c.bf16 %v970, %v962
    %v1075 = vpack.c.bf16 %v971, %v963
    %v1076 = vpack.c.bf16 %v972, %v964
    %v1077 = vpack.c.bf16 %v973, %v965
    %v1078 = vpack.c.bf16 %v974, %v966
    %v1079 = vpack.c.bf16 %v975, %v967
    %v1080 = vpack.c.bf16 %v976, %v968
    %v1081 = vpack.c.bf16 %v977, %v969
    %v1082 = vpack.c.bf16 %v986, %v978
    %v1083 = vpack.c.bf16 %v987, %v979
    %v1084 = vpack.c.bf16 %v988, %v980
    %v1085 = vpack.c.bf16 %v989, %v981
    %v1086 = vpack.c.bf16 %v990, %v982
    %v1087 = vpack.c.bf16 %v991, %v983
    %v1088 = vpack.c.bf16 %v992, %v984
    %v1089 = vpack.c.bf16 %v993, %v985
    %v1090 = vpack.c.bf16 %v1002, %v994
    %v1091 = vpack.c.bf16 %v1003, %v995
    %v1092 = vpack.c.bf16 %v1004, %v996
    %v1093 = vpack.c.bf16 %v1005, %v997
    %v1094 = vpack.c.bf16 %v1006, %v998
    %v1095 = vpack.c.bf16 %v1007, %v999
    %v1096 = vpack.c.bf16 %v1008, %v1000
    %v1097 = vpack.c.bf16 %v1009, %v1001
    %v1098 = vpack.c.bf16 %v1018, %v1010
    %v1099 = vpack.c.bf16 %v1019, %v1011
    %v1100 = vpack.c.bf16 %v1020, %v1012
    %v1101 = vpack.c.bf16 %v1021, %v1013
    %v1102 = vpack.c.bf16 %v1022, %v1014
    %v1103 = vpack.c.bf16 %v1023, %v1015
    %v1104 = vpack.c.bf16 %v1024, %v1016
    %v1105 = vpack.c.bf16 %v1025, %v1017
    %v1106 = vpack.c.bf16 %v1034, %v1026
    %v1107 = vpack.c.bf16 %v1035, %v1027
    %v1108 = vpack.c.bf16 %v1036, %v1028
    %v1109 = vpack.c.bf16 %v1037, %v1029
    %v1110 = vpack.c.bf16 %v1038, %v1030
    %v1111 = vpack.c.bf16 %v1039, %v1031
    %v1112 = vpack.c.bf16 %v1040, %v1032
    %v1113 = vpack.c.bf16 %v1041, %v1033
    %v1114 = vpack.c.bf16 %v1050, %v1042
    %v1115 = vpack.c.bf16 %v1051, %v1043
    %v1116 = vpack.c.bf16 %v1052, %v1044
    %v1117 = vpack.c.bf16 %v1053, %v1045
    %v1118 = vpack.c.bf16 %v1054, %v1046
    %v1119 = vpack.c.bf16 %v1055, %v1047
    %v1120 = vpack.c.bf16 %v1056, %v1048
    %v1121 = vpack.c.bf16 %v1057, %v1049
    %v1122 = vld [vmem:[#allocation2] sm:$0xf]
    %v1123 = vld [vmem:[#allocation2 + $0x4] sm:$0xf]
    %v1124 = vld [vmem:[#allocation2 + $0x8] sm:$0xf]
    %v1125 = vld [vmem:[#allocation2 + $0xc] sm:$0xf]
    %v1126 = vld [vmem:[#allocation2 + $0x10] sm:$0xf]
    %v1127 = vld [vmem:[#allocation2 + $0x14] sm:$0xf]
    %v1128 = vld [vmem:[#allocation2 + $0x18] sm:$0xf]
    %v1129 = vld [vmem:[#allocation2 + $0x1c] sm:$0xf]
    %v1130 = vld [vmem:[#allocation2 + $0x20] sm:$0xf]
    %v1131 = vld [vmem:[#allocation2 + $0x24] sm:$0xf]
    %v1132 = vld [vmem:[#allocation2 + $0x28] sm:$0xf]
    %v1133 = vld [vmem:[#allocation2 + $0x2c] sm:$0xf]
    %v1134 = vld [vmem:[#allocation2 + $0x30] sm:$0xf]
    %v1135 = vld [vmem:[#allocation2 + $0x34] sm:$0xf]
    %v1136 = vld [vmem:[#allocation2 + $0x38] sm:$0xf]
    %v1137 = vld [vmem:[#allocation2 + $0x3c] sm:$0xf]
    %v1138 = vld [vmem:[#allocation2 + $0x40] sm:$0xf]
    %v1139 = vld [vmem:[#allocation2 + $0x44] sm:$0xf]
    %v1140 = vld [vmem:[#allocation2 + $0x48] sm:$0xf]
    %v1141 = vld [vmem:[#allocation2 + $0x4c] sm:$0xf]
    %v1142 = vld [vmem:[#allocation2 + $0x50] sm:$0xf]
    %v1143 = vld [vmem:[#allocation2 + $0x54] sm:$0xf]
    %v1144 = vld [vmem:[#allocation2 + $0x58] sm:$0xf]
    %v1145 = vld [vmem:[#allocation2 + $0x5c] sm:$0xf]
    %v1146 = vld [vmem:[#allocation2 + $0x60] sm:$0xf]
    %v1147 = vld [vmem:[#allocation2 + $0x64] sm:$0xf]
    %v1148 = vld [vmem:[#allocation2 + $0x68] sm:$0xf]
    %v1149 = vld [vmem:[#allocation2 + $0x6c] sm:$0xf]
    %v1150 = vld [vmem:[#allocation2 + $0x70] sm:$0xf]
    %v1151 = vld [vmem:[#allocation2 + $0x74] sm:$0xf]
    %v1152 = vld [vmem:[#allocation2 + $0x78] sm:$0xf]
    %v1153 = vld [vmem:[#allocation2 + $0x7c] sm:$0xf]
    %v1154 = vld [vmem:[#allocation2 + $0x80] sm:$0xf]
    %v1155 = vld [vmem:[#allocation2 + $0x84] sm:$0xf]
    %v1156 = vld [vmem:[#allocation2 + $0x88] sm:$0xf]
    %v1157 = vld [vmem:[#allocation2 + $0x8c] sm:$0xf]
    %v1158 = vld [vmem:[#allocation2 + $0x90] sm:$0xf]
    %v1159 = vld [vmem:[#allocation2 + $0x94] sm:$0xf]
    %v1160 = vld [vmem:[#allocation2 + $0x98] sm:$0xf]
    %v1161 = vld [vmem:[#allocation2 + $0x9c] sm:$0xf]
    %v1162 = vld [vmem:[#allocation2 + $0xa0] sm:$0xf]
    %v1163 = vld [vmem:[#allocation2 + $0xa4] sm:$0xf]
    %v1164 = vld [vmem:[#allocation2 + $0xa8] sm:$0xf]
    %v1165 = vld [vmem:[#allocation2 + $0xac] sm:$0xf]
    %v1166 = vld [vmem:[#allocation2 + $0xb0] sm:$0xf]
    %v1167 = vld [vmem:[#allocation2 + $0xb4] sm:$0xf]
    %v1168 = vld [vmem:[#allocation2 + $0xb8] sm:$0xf]
    %v1169 = vld [vmem:[#allocation2 + $0xbc] sm:$0xf]
    %v1170 = vld [vmem:[#allocation2 + $0xc0] sm:$0xf]
    %v1171 = vld [vmem:[#allocation2 + $0xc4] sm:$0xf]
    %v1172 = vld [vmem:[#allocation2 + $0xc8] sm:$0xf]
    %v1173 = vld [vmem:[#allocation2 + $0xcc] sm:$0xf]
    %v1174 = vld [vmem:[#allocation2 + $0xd0] sm:$0xf]
    %v1175 = vld [vmem:[#allocation2 + $0xd4] sm:$0xf]
    %v1176 = vld [vmem:[#allocation2 + $0xd8] sm:$0xf]
    %v1177 = vld [vmem:[#allocation2 + $0xdc] sm:$0xf]
    %v1178 = vld [vmem:[#allocation2 + $0xe0] sm:$0xf]
    %v1179 = vld [vmem:[#allocation2 + $0xe4] sm:$0xf]
    %v1180 = vld [vmem:[#allocation2 + $0xe8] sm:$0xf]
    %v1181 = vld [vmem:[#allocation2 + $0xec] sm:$0xf]
    %v1182 = vld [vmem:[#allocation2 + $0xf0] sm:$0xf]
    %v1183 = vld [vmem:[#allocation2 + $0xf4] sm:$0xf]
    %v1184 = vld [vmem:[#allocation2 + $0xf8] sm:$0xf]
    %v1185 = vld [vmem:[#allocation2 + $0xfc] sm:$0xf]
    %v1186 = vld [vmem:[#allocation2 + $0x100] sm:$0xf]
    %v1187 = vld [vmem:[#allocation2 + $0x104] sm:$0xf]
    %v1188 = vld [vmem:[#allocation2 + $0x108] sm:$0xf]
    %v1189 = vld [vmem:[#allocation2 + $0x10c] sm:$0xf]
    %v1190 = vld [vmem:[#allocation2 + $0x110] sm:$0xf]
    %v1191 = vld [vmem:[#allocation2 + $0x114] sm:$0xf]
    %v1192 = vld [vmem:[#allocation2 + $0x118] sm:$0xf]
    %v1193 = vld [vmem:[#allocation2 + $0x11c] sm:$0xf]
    %v1194 = vld [vmem:[#allocation2 + $0x120] sm:$0xf]
    %v1195 = vld [vmem:[#allocation2 + $0x124] sm:$0xf]
    %v1196 = vld [vmem:[#allocation2 + $0x128] sm:$0xf]
    %v1197 = vld [vmem:[#allocation2 + $0x12c] sm:$0xf]
    %v1198 = vld [vmem:[#allocation2 + $0x130] sm:$0xf]
    %v1199 = vld [vmem:[#allocation2 + $0x134] sm:$0xf]
    %v1200 = vld [vmem:[#allocation2 + $0x138] sm:$0xf]
    %v1201 = vld [vmem:[#allocation2 + $0x13c] sm:$0xf]
    %v1202 = vld [vmem:[#allocation2 + $0x140] sm:$0xf]
    %v1203 = vld [vmem:[#allocation2 + $0x144] sm:$0xf]
    %v1204 = vld [vmem:[#allocation2 + $0x148] sm:$0xf]
    %v1205 = vld [vmem:[#allocation2 + $0x14c] sm:$0xf]
    %v1206 = vld [vmem:[#allocation2 + $0x150] sm:$0xf]
    %v1207 = vld [vmem:[#allocation2 + $0x154] sm:$0xf]
    %v1208 = vld [vmem:[#allocation2 + $0x158] sm:$0xf]
    %v1209 = vld [vmem:[#allocation2 + $0x15c] sm:$0xf]
    %v1210 = vld [vmem:[#allocation2 + $0x160] sm:$0xf]
    %v1211 = vld [vmem:[#allocation2 + $0x164] sm:$0xf]
    %v1212 = vld [vmem:[#allocation2 + $0x168] sm:$0xf]
    %v1213 = vld [vmem:[#allocation2 + $0x16c] sm:$0xf]
    %v1214 = vld [vmem:[#allocation2 + $0x170] sm:$0xf]
    %v1215 = vld [vmem:[#allocation2 + $0x174] sm:$0xf]
    %v1216 = vld [vmem:[#allocation2 + $0x178] sm:$0xf]
    %v1217 = vld [vmem:[#allocation2 + $0x17c] sm:$0xf]
    %v1218 = vld [vmem:[#allocation2 + $0x180] sm:$0xf]
    %v1219 = vld [vmem:[#allocation2 + $0x184] sm:$0xf]
    %v1220 = vld [vmem:[#allocation2 + $0x188] sm:$0xf]
    %v1221 = vld [vmem:[#allocation2 + $0x18c] sm:$0xf]
    %v1222 = vld [vmem:[#allocation2 + $0x190] sm:$0xf]
    %v1223 = vld [vmem:[#allocation2 + $0x194] sm:$0xf]
    %v1224 = vld [vmem:[#allocation2 + $0x198] sm:$0xf]
    %v1225 = vld [vmem:[#allocation2 + $0x19c] sm:$0xf]
    %v1226 = vld [vmem:[#allocation2 + $0x1a0] sm:$0xf]
    %v1227 = vld [vmem:[#allocation2 + $0x1a4] sm:$0xf]
    %v1228 = vld [vmem:[#allocation2 + $0x1a8] sm:$0xf]
    %v1229 = vld [vmem:[#allocation2 + $0x1ac] sm:$0xf]
    %v1230 = vld [vmem:[#allocation2 + $0x1b0] sm:$0xf]
    %v1231 = vld [vmem:[#allocation2 + $0x1b4] sm:$0xf]
    %v1232 = vld [vmem:[#allocation2 + $0x1b8] sm:$0xf]
    %v1233 = vld [vmem:[#allocation2 + $0x1bc] sm:$0xf]
    %v1234 = vld [vmem:[#allocation2 + $0x1c0] sm:$0xf]
    %v1235 = vld [vmem:[#allocation2 + $0x1c4] sm:$0xf]
    %v1236 = vld [vmem:[#allocation2 + $0x1c8] sm:$0xf]
    %v1237 = vld [vmem:[#allocation2 + $0x1cc] sm:$0xf]
    %v1238 = vld [vmem:[#allocation2 + $0x1d0] sm:$0xf]
    %v1239 = vld [vmem:[#allocation2 + $0x1d4] sm:$0xf]
    %v1240 = vld [vmem:[#allocation2 + $0x1d8] sm:$0xf]
    %v1241 = vld [vmem:[#allocation2 + $0x1dc] sm:$0xf]
    %v1242 = vld [vmem:[#allocation2 + $0x1e0] sm:$0xf]
    %v1243 = vld [vmem:[#allocation2 + $0x1e4] sm:$0xf]
    %v1244 = vld [vmem:[#allocation2 + $0x1e8] sm:$0xf]
    %v1245 = vld [vmem:[#allocation2 + $0x1ec] sm:$0xf]
    %v1246 = vld [vmem:[#allocation2 + $0x1f0] sm:$0xf]
    %v1247 = vld [vmem:[#allocation2 + $0x1f4] sm:$0xf]
    %v1248 = vld [vmem:[#allocation2 + $0x1f8] sm:$0xf]
    %v1249 = vld [vmem:[#allocation2 + $0x1fc] sm:$0xf]
    %v1250 = vld [vmem:[#allocation5] sm:$0xf]
    %v1251 = vld [vmem:[#allocation5 + $0x4] sm:$0xf]
    %v1252 = vld [vmem:[#allocation5 + $0x8] sm:$0xf]
    %v1253 = vld [vmem:[#allocation5 + $0xc] sm:$0xf]
    %v1254 = vld [vmem:[#allocation5 + $0x10] sm:$0xf]
    %v1255 = vld [vmem:[#allocation5 + $0x14] sm:$0xf]
    %v1256 = vld [vmem:[#allocation5 + $0x18] sm:$0xf]
    %v1257 = vld [vmem:[#allocation5 + $0x1c] sm:$0xf]
    %v1258 = vld [vmem:[#allocation5 + $0x20] sm:$0xf]
    %v1259 = vld [vmem:[#allocation5 + $0x24] sm:$0xf]
    %v1260 = vld [vmem:[#allocation5 + $0x28] sm:$0xf]
    %v1261 = vld [vmem:[#allocation5 + $0x2c] sm:$0xf]
    %v1262 = vld [vmem:[#allocation5 + $0x30] sm:$0xf]
    %v1263 = vld [vmem:[#allocation5 + $0x34] sm:$0xf]
    %v1264 = vld [vmem:[#allocation5 + $0x38] sm:$0xf]
    %v1265 = vld [vmem:[#allocation5 + $0x3c] sm:$0xf]
    %v1266 = vld [vmem:[#allocation5 + $0x40] sm:$0xf]
    %v1267 = vld [vmem:[#allocation5 + $0x44] sm:$0xf]
    %v1268 = vld [vmem:[#allocation5 + $0x48] sm:$0xf]
    %v1269 = vld [vmem:[#allocation5 + $0x4c] sm:$0xf]
    %v1270 = vld [vmem:[#allocation5 + $0x50] sm:$0xf]
    %v1271 = vld [vmem:[#allocation5 + $0x54] sm:$0xf]
    %v1272 = vld [vmem:[#allocation5 + $0x58] sm:$0xf]
    %v1273 = vld [vmem:[#allocation5 + $0x5c] sm:$0xf]
    %v1274 = vld [vmem:[#allocation5 + $0x60] sm:$0xf]
    %v1275 = vld [vmem:[#allocation5 + $0x64] sm:$0xf]
    %v1276 = vld [vmem:[#allocation5 + $0x68] sm:$0xf]
    %v1277 = vld [vmem:[#allocation5 + $0x6c] sm:$0xf]
    %v1278 = vld [vmem:[#allocation5 + $0x70] sm:$0xf]
    %v1279 = vld [vmem:[#allocation5 + $0x74] sm:$0xf]
    %v1280 = vld [vmem:[#allocation5 + $0x78] sm:$0xf]
    %v1281 = vld [vmem:[#allocation5 + $0x7c] sm:$0xf]
    %v1282 = vld [vmem:[#allocation5 + $0x80] sm:$0xf]
    %v1283 = vld [vmem:[#allocation5 + $0x84] sm:$0xf]
    %v1284 = vld [vmem:[#allocation5 + $0x88] sm:$0xf]
    %v1285 = vld [vmem:[#allocation5 + $0x8c] sm:$0xf]
    %v1286 = vld [vmem:[#allocation5 + $0x90] sm:$0xf]
    %v1287 = vld [vmem:[#allocation5 + $0x94] sm:$0xf]
    %v1288 = vld [vmem:[#allocation5 + $0x98] sm:$0xf]
    %v1289 = vld [vmem:[#allocation5 + $0x9c] sm:$0xf]
    %v1290 = vld [vmem:[#allocation5 + $0xa0] sm:$0xf]
    %v1291 = vld [vmem:[#allocation5 + $0xa4] sm:$0xf]
    %v1292 = vld [vmem:[#allocation5 + $0xa8] sm:$0xf]
    %v1293 = vld [vmem:[#allocation5 + $0xac] sm:$0xf]
    %v1294 = vld [vmem:[#allocation5 + $0xb0] sm:$0xf]
    %v1295 = vld [vmem:[#allocation5 + $0xb4] sm:$0xf]
    %v1296 = vld [vmem:[#allocation5 + $0xb8] sm:$0xf]
    %v1297 = vld [vmem:[#allocation5 + $0xbc] sm:$0xf]
    %v1298 = vld [vmem:[#allocation5 + $0xc0] sm:$0xf]
    %v1299 = vld [vmem:[#allocation5 + $0xc4] sm:$0xf]
    %v1300 = vld [vmem:[#allocation5 + $0xc8] sm:$0xf]
    %v1301 = vld [vmem:[#allocation5 + $0xcc] sm:$0xf]
    %v1302 = vld [vmem:[#allocation5 + $0xd0] sm:$0xf]
    %v1303 = vld [vmem:[#allocation5 + $0xd4] sm:$0xf]
    %v1304 = vld [vmem:[#allocation5 + $0xd8] sm:$0xf]
    %v1305 = vld [vmem:[#allocation5 + $0xdc] sm:$0xf]
    %v1306 = vld [vmem:[#allocation5 + $0xe0] sm:$0xf]
    %v1307 = vld [vmem:[#allocation5 + $0xe4] sm:$0xf]
    %v1308 = vld [vmem:[#allocation5 + $0xe8] sm:$0xf]
    %v1309 = vld [vmem:[#allocation5 + $0xec] sm:$0xf]
    %v1310 = vld [vmem:[#allocation5 + $0xf0] sm:$0xf]
    %v1311 = vld [vmem:[#allocation5 + $0xf4] sm:$0xf]
    %v1312 = vld [vmem:[#allocation5 + $0xf8] sm:$0xf]
    %v1313 = vld [vmem:[#allocation5 + $0xfc] sm:$0xf]
    %v1314 = vld [vmem:[#allocation5 + $0x100] sm:$0xf]
    %v1315 = vld [vmem:[#allocation5 + $0x104] sm:$0xf]
    %v1316 = vld [vmem:[#allocation5 + $0x108] sm:$0xf]
    %v1317 = vld [vmem:[#allocation5 + $0x10c] sm:$0xf]
    %v1318 = vld [vmem:[#allocation5 + $0x110] sm:$0xf]
    %v1319 = vld [vmem:[#allocation5 + $0x114] sm:$0xf]
    %v1320 = vld [vmem:[#allocation5 + $0x118] sm:$0xf]
    %v1321 = vld [vmem:[#allocation5 + $0x11c] sm:$0xf]
    %v1322 = vld [vmem:[#allocation5 + $0x120] sm:$0xf]
    %v1323 = vld [vmem:[#allocation5 + $0x124] sm:$0xf]
    %v1324 = vld [vmem:[#allocation5 + $0x128] sm:$0xf]
    %v1325 = vld [vmem:[#allocation5 + $0x12c] sm:$0xf]
    %v1326 = vld [vmem:[#allocation5 + $0x130] sm:$0xf]
    %v1327 = vld [vmem:[#allocation5 + $0x134] sm:$0xf]
    %v1328 = vld [vmem:[#allocation5 + $0x138] sm:$0xf]
    %v1329 = vld [vmem:[#allocation5 + $0x13c] sm:$0xf]
    %v1330 = vld [vmem:[#allocation5 + $0x140] sm:$0xf]
    %v1331 = vld [vmem:[#allocation5 + $0x144] sm:$0xf]
    %v1332 = vld [vmem:[#allocation5 + $0x148] sm:$0xf]
    %v1333 = vld [vmem:[#allocation5 + $0x14c] sm:$0xf]
    %v1334 = vld [vmem:[#allocation5 + $0x150] sm:$0xf]
    %v1335 = vld [vmem:[#allocation5 + $0x154] sm:$0xf]
    %v1336 = vld [vmem:[#allocation5 + $0x158] sm:$0xf]
    %v1337 = vld [vmem:[#allocation5 + $0x15c] sm:$0xf]
    %v1338 = vld [vmem:[#allocation5 + $0x160] sm:$0xf]
    %v1339 = vld [vmem:[#allocation5 + $0x164] sm:$0xf]
    %v1340 = vld [vmem:[#allocation5 + $0x168] sm:$0xf]
    %v1341 = vld [vmem:[#allocation5 + $0x16c] sm:$0xf]
    %v1342 = vld [vmem:[#allocation5 + $0x170] sm:$0xf]
    %v1343 = vld [vmem:[#allocation5 + $0x174] sm:$0xf]
    %v1344 = vld [vmem:[#allocation5 + $0x178] sm:$0xf]
    %v1345 = vld [vmem:[#allocation5 + $0x17c] sm:$0xf]
    %v1346 = vld [vmem:[#allocation5 + $0x180] sm:$0xf]
    %v1347 = vld [vmem:[#allocation5 + $0x184] sm:$0xf]
    %v1348 = vld [vmem:[#allocation5 + $0x188] sm:$0xf]
    %v1349 = vld [vmem:[#allocation5 + $0x18c] sm:$0xf]
    %v1350 = vld [vmem:[#allocation5 + $0x190] sm:$0xf]
    %v1351 = vld [vmem:[#allocation5 + $0x194] sm:$0xf]
    %v1352 = vld [vmem:[#allocation5 + $0x198] sm:$0xf]
    %v1353 = vld [vmem:[#allocation5 + $0x19c] sm:$0xf]
    %v1354 = vld [vmem:[#allocation5 + $0x1a0] sm:$0xf]
    %v1355 = vld [vmem:[#allocation5 + $0x1a4] sm:$0xf]
    %v1356 = vld [vmem:[#allocation5 + $0x1a8] sm:$0xf]
    %v1357 = vld [vmem:[#allocation5 + $0x1ac] sm:$0xf]
    %v1358 = vld [vmem:[#allocation5 + $0x1b0] sm:$0xf]
    %v1359 = vld [vmem:[#allocation5 + $0x1b4] sm:$0xf]
    %v1360 = vld [vmem:[#allocation5 + $0x1b8] sm:$0xf]
    %v1361 = vld [vmem:[#allocation5 + $0x1bc] sm:$0xf]
    %v1362 = vld [vmem:[#allocation5 + $0x1c0] sm:$0xf]
    %v1363 = vld [vmem:[#allocation5 + $0x1c4] sm:$0xf]
    %v1364 = vld [vmem:[#allocation5 + $0x1c8] sm:$0xf]
    %v1365 = vld [vmem:[#allocation5 + $0x1cc] sm:$0xf]
    %v1366 = vld [vmem:[#allocation5 + $0x1d0] sm:$0xf]
    %v1367 = vld [vmem:[#allocation5 + $0x1d4] sm:$0xf]
    %v1368 = vld [vmem:[#allocation5 + $0x1d8] sm:$0xf]
    %v1369 = vld [vmem:[#allocation5 + $0x1dc] sm:$0xf]
    %v1370 = vld [vmem:[#allocation5 + $0x1e0] sm:$0xf]
    %v1371 = vld [vmem:[#allocation5 + $0x1e4] sm:$0xf]
    %v1372 = vld [vmem:[#allocation5 + $0x1e8] sm:$0xf]
    %v1373 = vld [vmem:[#allocation5 + $0x1ec] sm:$0xf]
    %v1374 = vld [vmem:[#allocation5 + $0x1f0] sm:$0xf]
    %v1375 = vld [vmem:[#allocation5 + $0x1f4] sm:$0xf]
    %v1376 = vld [vmem:[#allocation5 + $0x1f8] sm:$0xf]
    %v1377 = vld [vmem:[#allocation5 + $0x1fc] sm:$0xf]
    %v1506 = vunpack.c.l.b16 %v1250
    %v1507 = vunpack.c.l.b16 %v1251
    %v1508 = vunpack.c.l.b16 %v1252
    %v1509 = vunpack.c.l.b16 %v1253
    %v1510 = vunpack.c.l.b16 %v1254
    %v1511 = vunpack.c.l.b16 %v1255
    %v1512 = vunpack.c.l.b16 %v1256
    %v1513 = vunpack.c.l.b16 %v1257
    %v1514 = vunpack.c.l.b16 %v1258
    %v1515 = vunpack.c.l.b16 %v1259
    %v1516 = vunpack.c.l.b16 %v1260
    %v1517 = vunpack.c.l.b16 %v1261
    %v1518 = vunpack.c.l.b16 %v1262
    %v1519 = vunpack.c.l.b16 %v1263
    %v1520 = vunpack.c.l.b16 %v1264
    %v1521 = vunpack.c.l.b16 %v1265
    %v1522 = vunpack.c.l.b16 %v1266
    %v1523 = vunpack.c.l.b16 %v1267
    %v1524 = vunpack.c.l.b16 %v1268
    %v1525 = vunpack.c.l.b16 %v1269
    %v1526 = vunpack.c.l.b16 %v1270
    %v1527 = vunpack.c.l.b16 %v1271
    %v1528 = vunpack.c.l.b16 %v1272
    %v1529 = vunpack.c.l.b16 %v1273
    %v1530 = vunpack.c.l.b16 %v1274
    %v1531 = vunpack.c.l.b16 %v1275
    %v1532 = vunpack.c.l.b16 %v1276
    %v1533 = vunpack.c.l.b16 %v1277
    %v1534 = vunpack.c.l.b16 %v1278
    %v1535 = vunpack.c.l.b16 %v1279
    %v1536 = vunpack.c.l.b16 %v1280
    %v1537 = vunpack.c.l.b16 %v1281
    %v1538 = vunpack.c.l.b16 %v1282
    %v1539 = vunpack.c.l.b16 %v1283
    %v1540 = vunpack.c.l.b16 %v1284
    %v1541 = vunpack.c.l.b16 %v1285
    %v1542 = vunpack.c.l.b16 %v1286
    %v1543 = vunpack.c.l.b16 %v1287
    %v1544 = vunpack.c.l.b16 %v1288
    %v1545 = vunpack.c.l.b16 %v1289
    %v1546 = vunpack.c.l.b16 %v1290
    %v1547 = vunpack.c.l.b16 %v1291
    %v1548 = vunpack.c.l.b16 %v1292
    %v1549 = vunpack.c.l.b16 %v1293
    %v1550 = vunpack.c.l.b16 %v1294
    %v1551 = vunpack.c.l.b16 %v1295
    %v1552 = vunpack.c.l.b16 %v1296
    %v1553 = vunpack.c.l.b16 %v1297
    %v1554 = vunpack.c.l.b16 %v1298
    %v1555 = vunpack.c.l.b16 %v1299
    %v1556 = vunpack.c.l.b16 %v1300
    %v1557 = vunpack.c.l.b16 %v1301
    %v1558 = vunpack.c.l.b16 %v1302
    %v1559 = vunpack.c.l.b16 %v1303
    %v1560 = vunpack.c.l.b16 %v1304
    %v1561 = vunpack.c.l.b16 %v1305
    %v1562 = vunpack.c.l.b16 %v1306
    %v1563 = vunpack.c.l.b16 %v1307
    %v1564 = vunpack.c.l.b16 %v1308
    %v1565 = vunpack.c.l.b16 %v1309
    %v1566 = vunpack.c.l.b16 %v1310
    %v1567 = vunpack.c.l.b16 %v1311
    %v1568 = vunpack.c.l.b16 %v1312
    %v1569 = vunpack.c.l.b16 %v1313
    %v1570 = vunpack.c.l.b16 %v1314
    %v1571 = vunpack.c.l.b16 %v1315
    %v1572 = vunpack.c.l.b16 %v1316
    %v1573 = vunpack.c.l.b16 %v1317
    %v1574 = vunpack.c.l.b16 %v1318
    %v1575 = vunpack.c.l.b16 %v1319
    %v1576 = vunpack.c.l.b16 %v1320
    %v1577 = vunpack.c.l.b16 %v1321
    %v1578 = vunpack.c.l.b16 %v1322
    %v1579 = vunpack.c.l.b16 %v1323
    %v1580 = vunpack.c.l.b16 %v1324
    %v1581 = vunpack.c.l.b16 %v1325
    %v1582 = vunpack.c.l.b16 %v1326
    %v1583 = vunpack.c.l.b16 %v1327
    %v1584 = vunpack.c.l.b16 %v1328
    %v1585 = vunpack.c.l.b16 %v1329
    %v1586 = vunpack.c.l.b16 %v1330
    %v1587 = vunpack.c.l.b16 %v1331
    %v1588 = vunpack.c.l.b16 %v1332
    %v1589 = vunpack.c.l.b16 %v1333
    %v1590 = vunpack.c.l.b16 %v1334
    %v1591 = vunpack.c.l.b16 %v1335
    %v1592 = vunpack.c.l.b16 %v1336
    %v1593 = vunpack.c.l.b16 %v1337
    %v1594 = vunpack.c.l.b16 %v1338
    %v1595 = vunpack.c.l.b16 %v1339
    %v1596 = vunpack.c.l.b16 %v1340
    %v1597 = vunpack.c.l.b16 %v1341
    %v1598 = vunpack.c.l.b16 %v1342
    %v1599 = vunpack.c.l.b16 %v1343
    %v1600 = vunpack.c.l.b16 %v1344
    %v1601 = vunpack.c.l.b16 %v1345
    %v1602 = vunpack.c.l.b16 %v1346
    %v1603 = vunpack.c.l.b16 %v1347
    %v1604 = vunpack.c.l.b16 %v1348
    %v1605 = vunpack.c.l.b16 %v1349
    %v1606 = vunpack.c.l.b16 %v1350
    %v1607 = vunpack.c.l.b16 %v1351
    %v1608 = vunpack.c.l.b16 %v1352
    %v1609 = vunpack.c.l.b16 %v1353
    %v1610 = vunpack.c.l.b16 %v1354
    %v1611 = vunpack.c.l.b16 %v1355
    %v1612 = vunpack.c.l.b16 %v1356
    %v1613 = vunpack.c.l.b16 %v1357
    %v1614 = vunpack.c.l.b16 %v1358
    %v1615 = vunpack.c.l.b16 %v1359
    %v1616 = vunpack.c.l.b16 %v1360
    %v1617 = vunpack.c.l.b16 %v1361
    %v1618 = vunpack.c.l.b16 %v1362
    %v1619 = vunpack.c.l.b16 %v1363
    %v1620 = vunpack.c.l.b16 %v1364
    %v1621 = vunpack.c.l.b16 %v1365
    %v1622 = vunpack.c.l.b16 %v1366
    %v1623 = vunpack.c.l.b16 %v1367
    %v1624 = vunpack.c.l.b16 %v1368
    %v1625 = vunpack.c.l.b16 %v1369
    %v1626 = vunpack.c.l.b16 %v1370
    %v1627 = vunpack.c.l.b16 %v1371
    %v1628 = vunpack.c.l.b16 %v1372
    %v1629 = vunpack.c.l.b16 %v1373
    %v1630 = vunpack.c.l.b16 %v1374
    %v1631 = vunpack.c.l.b16 %v1375
    %v1632 = vunpack.c.l.b16 %v1376
    %v1633 = vunpack.c.l.b16 %v1377
    %v1634 = vpack.c.b16 %v1507, %v1506
    %v1635 = vpack.c.b16 %v1509, %v1508
    %v1636 = vpack.c.b16 %v1511, %v1510
    %v1637 = vpack.c.b16 %v1513, %v1512
    %v1638 = vpack.c.b16 %v1515, %v1514
    %v1639 = vpack.c.b16 %v1517, %v1516
    %v1640 = vpack.c.b16 %v1519, %v1518
    %v1641 = vpack.c.b16 %v1521, %v1520
    %v1642 = vpack.c.b16 %v1523, %v1522
    %v1643 = vpack.c.b16 %v1525, %v1524
    %v1644 = vpack.c.b16 %v1527, %v1526
    %v1645 = vpack.c.b16 %v1529, %v1528
    %v1646 = vpack.c.b16 %v1531, %v1530
    %v1647 = vpack.c.b16 %v1533, %v1532
    %v1648 = vpack.c.b16 %v1535, %v1534
    %v1649 = vpack.c.b16 %v1537, %v1536
    %v1650 = vpack.c.b16 %v1539, %v1538
    %v1651 = vpack.c.b16 %v1541, %v1540
    %v1652 = vpack.c.b16 %v1543, %v1542
    %v1653 = vpack.c.b16 %v1545, %v1544
    %v1654 = vpack.c.b16 %v1547, %v1546
    %v1655 = vpack.c.b16 %v1549, %v1548
    %v1656 = vpack.c.b16 %v1551, %v1550
    %v1657 = vpack.c.b16 %v1553, %v1552
    %v1658 = vpack.c.b16 %v1555, %v1554
    %v1659 = vpack.c.b16 %v1557, %v1556
    %v1660 = vpack.c.b16 %v1559, %v1558
    %v1661 = vpack.c.b16 %v1561, %v1560
    %v1662 = vpack.c.b16 %v1563, %v1562
    %v1663 = vpack.c.b16 %v1565, %v1564
    %v1664 = vpack.c.b16 %v1567, %v1566
    %v1665 = vpack.c.b16 %v1569, %v1568
    %v1666 = vpack.c.b16 %v1571, %v1570
    %v1667 = vpack.c.b16 %v1573, %v1572
    %v1668 = vpack.c.b16 %v1575, %v1574
    %v1669 = vpack.c.b16 %v1577, %v1576
    %v1670 = vpack.c.b16 %v1579, %v1578
    %v1671 = vpack.c.b16 %v1581, %v1580
    %v1672 = vpack.c.b16 %v1583, %v1582
    %v1673 = vpack.c.b16 %v1585, %v1584
    %v1674 = vpack.c.b16 %v1587, %v1586
    %v1675 = vpack.c.b16 %v1589, %v1588
    %v1676 = vpack.c.b16 %v1591, %v1590
    %v1677 = vpack.c.b16 %v1593, %v1592
    %v1678 = vpack.c.b16 %v1595, %v1594
    %v1679 = vpack.c.b16 %v1597, %v1596
    %v1680 = vpack.c.b16 %v1599, %v1598
    %v1681 = vpack.c.b16 %v1601, %v1600
    %v1682 = vpack.c.b16 %v1603, %v1602
    %v1683 = vpack.c.b16 %v1605, %v1604
    %v1684 = vpack.c.b16 %v1607, %v1606
    %v1685 = vpack.c.b16 %v1609, %v1608
    %v1686 = vpack.c.b16 %v1611, %v1610
    %v1687 = vpack.c.b16 %v1613, %v1612
    %v1688 = vpack.c.b16 %v1615, %v1614
    %v1689 = vpack.c.b16 %v1617, %v1616
    %v1690 = vpack.c.b16 %v1619, %v1618
    %v1691 = vpack.c.b16 %v1621, %v1620
    %v1692 = vpack.c.b16 %v1623, %v1622
    %v1693 = vpack.c.b16 %v1625, %v1624
    %v1694 = vpack.c.b16 %v1627, %v1626
    %v1695 = vpack.c.b16 %v1629, %v1628
    %v1696 = vpack.c.b16 %v1631, %v1630
    %v1697 = vpack.c.b16 %v1633, %v1632
    %1762 = vmatpush.bf16.msra.mxu0 %v1641
    %1763 = vmatpush.bf16.msra.mxu0 %v1640
    %1764 = vmatpush.bf16.msra.mxu0 %v1639
    %1765 = vmatpush.bf16.msra.mxu0 %v1638
    %1766 = vmatpush.bf16.msra.mxu0 %v1637
    %1767 = vmatpush.bf16.msra.mxu0 %v1636
    %1768 = vmatpush.bf16.msra.mxu0 %v1635
    %1769 = vmatpush.bf16.msra.mxu0 %v1634
    %1770 = vmatmul.bf16.gmra.mxu0 %v1058
    %v1771 = vpop.f32.mrf.mxu0
    %v1772 = vadd.f32 0.0, %v1771
    %v1773 = vpop.f32.mrf.mxu0
    %v1774 = vadd.f32 0.0, %v1773
    %1775 = vmatmul.bf16.gmra.mxu0 %v1066
    %v1776 = vpop.f32.mrf.mxu0
    %v1777 = vadd.f32 0.0, %v1776
    %v1778 = vpop.f32.mrf.mxu0
    %v1779 = vadd.f32 0.0, %v1778
    %1780 = vmatmul.bf16.gmra.mxu0 %v1074
    %v1781 = vpop.f32.mrf.mxu0
    %v1782 = vadd.f32 0.0, %v1781
    %v1783 = vpop.f32.mrf.mxu0
    %v1784 = vadd.f32 0.0, %v1783
    %1785 = vmatmul.bf16.gmra.mxu0 %v1082
    %v1786 = vpop.f32.mrf.mxu0
    %v1787 = vadd.f32 0.0, %v1786
    %v1788 = vpop.f32.mrf.mxu0
    %v1789 = vadd.f32 0.0, %v1788
    %1790 = vmatmul.bf16.gmra.mxu0 %v1090
    %v1791 = vpop.f32.mrf.mxu0
    %v1792 = vadd.f32 0.0, %v1791
    %v1793 = vpop.f32.mrf.mxu0
    %v1794 = vadd.f32 0.0, %v1793
    %1795 = vmatmul.bf16.gmra.mxu0 %v1098
    %v1796 = vpop.f32.mrf.mxu0
    %v1797 = vadd.f32 0.0, %v1796
    %v1798 = vpop.f32.mrf.mxu0
    %v1799 = vadd.f32 0.0, %v1798
    %1800 = vmatmul.bf16.gmra.mxu0 %v1106
    %v1801 = vpop.f32.mrf.mxu0
    %v1802 = vadd.f32 0.0, %v1801
    %v1803 = vpop.f32.mrf.mxu0
    %v1804 = vadd.f32 0.0, %v1803
    %1805 = vmatmul.bf16.gmra.mxu0 %v1114
    %v1806 = vpop.f32.mrf.mxu0
    %v1807 = vadd.f32 0.0, %v1806
    %v1808 = vpop.f32.mrf.mxu0
    %v1809 = vadd.f32 0.0, %v1808
    %1810 = vdwg.mxu0
    %1811 = vmatpush.bf16.msra.mxu0 %v1649
    %1812 = vmatpush.bf16.msra.mxu0 %v1648
    %1813 = vmatpush.bf16.msra.mxu0 %v1647
    %1814 = vmatpush.bf16.msra.mxu0 %v1646
    %1815 = vmatpush.bf16.msra.mxu0 %v1645
    %1816 = vmatpush.bf16.msra.mxu0 %v1644
    %1817 = vmatpush.bf16.msra.mxu0 %v1643
    %1818 = vmatpush.bf16.msra.mxu0 %v1642
    %1819 = vmatmul.bf16.gmra.mxu0 %v1059
    %v1820 = vpop.f32.mrf.mxu0
    %v1821 = vadd.f32 %v1772, %v1820
    %v1822 = vpop.f32.mrf.mxu0
    %v1823 = vadd.f32 %v1774, %v1822
    %1824 = vmatmul.bf16.gmra.mxu0 %v1067
    %v1825 = vpop.f32.mrf.mxu0
    %v1826 = vadd.f32 %v1777, %v1825
    %v1827 = vpop.f32.mrf.mxu0
    %v1828 = vadd.f32 %v1779, %v1827
    %1829 = vmatmul.bf16.gmra.mxu0 %v1075
    %v1830 = vpop.f32.mrf.mxu0
    %v1831 = vadd.f32 %v1782, %v1830
    %v1832 = vpop.f32.mrf.mxu0
    %v1833 = vadd.f32 %v1784, %v1832
    %1834 = vmatmul.bf16.gmra.mxu0 %v1083
    %v1835 = vpop.f32.mrf.mxu0
    %v1836 = vadd.f32 %v1787, %v1835
    %v1837 = vpop.f32.mrf.mxu0
    %v1838 = vadd.f32 %v1789, %v1837
    %1839 = vmatmul.bf16.gmra.mxu0 %v1091
    %v1840 = vpop.f32.mrf.mxu0
    %v1841 = vadd.f32 %v1792, %v1840
    %v1842 = vpop.f32.mrf.mxu0
    %v1843 = vadd.f32 %v1794, %v1842
    %1844 = vmatmul.bf16.gmra.mxu0 %v1099
    %v1845 = vpop.f32.mrf.mxu0
    %v1846 = vadd.f32 %v1797, %v1845
    %v1847 = vpop.f32.mrf.mxu0
    %v1848 = vadd.f32 %v1799, %v1847
    %1849 = vmatmul.bf16.gmra.mxu0 %v1107
    %v1850 = vpop.f32.mrf.mxu0
    %v1851 = vadd.f32 %v1802, %v1850
    %v1852 = vpop.f32.mrf.mxu0
    %v1853 = vadd.f32 %v1804, %v1852
    %1854 = vmatmul.bf16.gmra.mxu0 %v1115
    %v1855 = vpop.f32.mrf.mxu0
    %v1856 = vadd.f32 %v1807, %v1855
    %v1857 = vpop.f32.mrf.mxu0
    %v1858 = vadd.f32 %v1809, %v1857
    %1859 = vdwg.mxu0
    %1860 = vmatpush.bf16.msra.mxu0 %v1657
    %1861 = vmatpush.bf16.msra.mxu0 %v1656
    %1862 = vmatpush.bf16.msra.mxu0 %v1655
    %1863 = vmatpush.bf16.msra.mxu0 %v1654
    %1864 = vmatpush.bf16.msra.mxu0 %v1653
    %1865 = vmatpush.bf16.msra.mxu0 %v1652
    %1866 = vmatpush.bf16.msra.mxu0 %v1651
    %1867 = vmatpush.bf16.msra.mxu0 %v1650
    %1868 = vmatmul.bf16.gmra.mxu0 %v1060
    %v1869 = vpop.f32.mrf.mxu0
    %v1870 = vadd.f32 %v1821, %v1869
    %v1871 = vpop.f32.mrf.mxu0
    %v1872 = vadd.f32 %v1823, %v1871
    %1873 = vmatmul.bf16.gmra.mxu0 %v1068
    %v1874 = vpop.f32.mrf.mxu0
    %v1875 = vadd.f32 %v1826, %v1874
    %v1876 = vpop.f32.mrf.mxu0
    %v1877 = vadd.f32 %v1828, %v1876
    %1878 = vmatmul.bf16.gmra.mxu0 %v1076
    %v1879 = vpop.f32.mrf.mxu0
    %v1880 = vadd.f32 %v1831, %v1879
    %v1881 = vpop.f32.mrf.mxu0
    %v1882 = vadd.f32 %v1833, %v1881
    %1883 = vmatmul.bf16.gmra.mxu0 %v1084
    %v1884 = vpop.f32.mrf.mxu0
    %v1885 = vadd.f32 %v1836, %v1884
    %v1886 = vpop.f32.mrf.mxu0
    %v1887 = vadd.f32 %v1838, %v1886
    %1888 = vmatmul.bf16.gmra.mxu0 %v1092
    %v1889 = vpop.f32.mrf.mxu0
    %v1890 = vadd.f32 %v1841, %v1889
    %v1891 = vpop.f32.mrf.mxu0
    %v1892 = vadd.f32 %v1843, %v1891
    %1893 = vmatmul.bf16.gmra.mxu0 %v1100
    %v1894 = vpop.f32.mrf.mxu0
    %v1895 = vadd.f32 %v1846, %v1894
    %v1896 = vpop.f32.mrf.mxu0
    %v1897 = vadd.f32 %v1848, %v1896
    %1898 = vmatmul.bf16.gmra.mxu0 %v1108
    %v1899 = vpop.f32.mrf.mxu0
    %v1900 = vadd.f32 %v1851, %v1899
    %v1901 = vpop.f32.mrf.mxu0
    %v1902 = vadd.f32 %v1853, %v1901
    %1903 = vmatmul.bf16.gmra.mxu0 %v1116
    %v1904 = vpop.f32.mrf.mxu0
    %v1905 = vadd.f32 %v1856, %v1904
    %v1906 = vpop.f32.mrf.mxu0
    %v1907 = vadd.f32 %v1858, %v1906
    %1908 = vdwg.mxu0
    %1909 = vmatpush.bf16.msra.mxu0 %v1665
    %1910 = vmatpush.bf16.msra.mxu0 %v1664
    %1911 = vmatpush.bf16.msra.mxu0 %v1663
    %1912 = vmatpush.bf16.msra.mxu0 %v1662
    %1913 = vmatpush.bf16.msra.mxu0 %v1661
    %1914 = vmatpush.bf16.msra.mxu0 %v1660
    %1915 = vmatpush.bf16.msra.mxu0 %v1659
    %1916 = vmatpush.bf16.msra.mxu0 %v1658
    %1917 = vmatmul.bf16.gmra.mxu0 %v1061
    %v1918 = vpop.f32.mrf.mxu0
    %v1919 = vadd.f32 %v1870, %v1918
    %v1920 = vpop.f32.mrf.mxu0
    %v1921 = vadd.f32 %v1872, %v1920
    %1922 = vmatmul.bf16.gmra.mxu0 %v1069
    %v1923 = vpop.f32.mrf.mxu0
    %v1924 = vadd.f32 %v1875, %v1923
    %v1925 = vpop.f32.mrf.mxu0
    %v1926 = vadd.f32 %v1877, %v1925
    %1927 = vmatmul.bf16.gmra.mxu0 %v1077
    %v1928 = vpop.f32.mrf.mxu0
    %v1929 = vadd.f32 %v1880, %v1928
    %v1930 = vpop.f32.mrf.mxu0
    %v1931 = vadd.f32 %v1882, %v1930
    %1932 = vmatmul.bf16.gmra.mxu0 %v1085
    %v1933 = vpop.f32.mrf.mxu0
    %v1934 = vadd.f32 %v1885, %v1933
    %v1935 = vpop.f32.mrf.mxu0
    %v1936 = vadd.f32 %v1887, %v1935
    %1937 = vmatmul.bf16.gmra.mxu0 %v1093
    %v1938 = vpop.f32.mrf.mxu0
    %v1939 = vadd.f32 %v1890, %v1938
    %v1940 = vpop.f32.mrf.mxu0
    %v1941 = vadd.f32 %v1892, %v1940
    %1942 = vmatmul.bf16.gmra.mxu0 %v1101
    %v1943 = vpop.f32.mrf.mxu0
    %v1944 = vadd.f32 %v1895, %v1943
    %v1945 = vpop.f32.mrf.mxu0
    %v1946 = vadd.f32 %v1897, %v1945
    %1947 = vmatmul.bf16.gmra.mxu0 %v1109
    %v1948 = vpop.f32.mrf.mxu0
    %v1949 = vadd.f32 %v1900, %v1948
    %v1950 = vpop.f32.mrf.mxu0
    %v1951 = vadd.f32 %v1902, %v1950
    %1952 = vmatmul.bf16.gmra.mxu0 %v1117
    %v1953 = vpop.f32.mrf.mxu0
    %v1954 = vadd.f32 %v1905, %v1953
    %v1955 = vpop.f32.mrf.mxu0
    %v1956 = vadd.f32 %v1907, %v1955
    %1957 = vdwg.mxu0
    %1958 = vmatpush.bf16.msra.mxu0 %v1673
    %1959 = vmatpush.bf16.msra.mxu0 %v1672
    %1960 = vmatpush.bf16.msra.mxu0 %v1671
    %1961 = vmatpush.bf16.msra.mxu0 %v1670
    %1962 = vmatpush.bf16.msra.mxu0 %v1669
    %1963 = vmatpush.bf16.msra.mxu0 %v1668
    %1964 = vmatpush.bf16.msra.mxu0 %v1667
    %1965 = vmatpush.bf16.msra.mxu0 %v1666
    %1966 = vmatmul.bf16.gmra.mxu0 %v1062
    %v1967 = vpop.f32.mrf.mxu0
    %v1968 = vadd.f32 %v1919, %v1967
    %v1969 = vpop.f32.mrf.mxu0
    %v1970 = vadd.f32 %v1921, %v1969
    %1971 = vmatmul.bf16.gmra.mxu0 %v1070
    %v1972 = vpop.f32.mrf.mxu0
    %v1973 = vadd.f32 %v1924, %v1972
    %v1974 = vpop.f32.mrf.mxu0
    %v1975 = vadd.f32 %v1926, %v1974
    %1976 = vmatmul.bf16.gmra.mxu0 %v1078
    %v1977 = vpop.f32.mrf.mxu0
    %v1978 = vadd.f32 %v1929, %v1977
    %v1979 = vpop.f32.mrf.mxu0
    %v1980 = vadd.f32 %v1931, %v1979
    %1981 = vmatmul.bf16.gmra.mxu0 %v1086
    %v1982 = vpop.f32.mrf.mxu0
    %v1983 = vadd.f32 %v1934, %v1982
    %v1984 = vpop.f32.mrf.mxu0
    %v1985 = vadd.f32 %v1936, %v1984
    %1986 = vmatmul.bf16.gmra.mxu0 %v1094
    %v1987 = vpop.f32.mrf.mxu0
    %v1988 = vadd.f32 %v1939, %v1987
    %v1989 = vpop.f32.mrf.mxu0
    %v1990 = vadd.f32 %v1941, %v1989
    %1991 = vmatmul.bf16.gmra.mxu0 %v1102
    %v1992 = vpop.f32.mrf.mxu0
    %v1993 = vadd.f32 %v1944, %v1992
    %v1994 = vpop.f32.mrf.mxu0
    %v1995 = vadd.f32 %v1946, %v1994
    %1996 = vmatmul.bf16.gmra.mxu0 %v1110
    %v1997 = vpop.f32.mrf.mxu0
    %v1998 = vadd.f32 %v1949, %v1997
    %v1999 = vpop.f32.mrf.mxu0
    %v2000 = vadd.f32 %v1951, %v1999
    %2001 = vmatmul.bf16.gmra.mxu0 %v1118
    %v2002 = vpop.f32.mrf.mxu0
    %v2003 = vadd.f32 %v1954, %v2002
    %v2004 = vpop.f32.mrf.mxu0
    %v2005 = vadd.f32 %v1956, %v2004
    %2006 = vdwg.mxu0
    %2007 = vmatpush.bf16.msra.mxu0 %v1681
    %2008 = vmatpush.bf16.msra.mxu0 %v1680
    %2009 = vmatpush.bf16.msra.mxu0 %v1679
    %2010 = vmatpush.bf16.msra.mxu0 %v1678
    %2011 = vmatpush.bf16.msra.mxu0 %v1677
    %2012 = vmatpush.bf16.msra.mxu0 %v1676
    %2013 = vmatpush.bf16.msra.mxu0 %v1675
    %2014 = vmatpush.bf16.msra.mxu0 %v1674
    %2015 = vmatmul.bf16.gmra.mxu0 %v1063
    %v2016 = vpop.f32.mrf.mxu0
    %v2017 = vadd.f32 %v1968, %v2016
    %v2018 = vpop.f32.mrf.mxu0
    %v2019 = vadd.f32 %v1970, %v2018
    %2020 = vmatmul.bf16.gmra.mxu0 %v1071
    %v2021 = vpop.f32.mrf.mxu0
    %v2022 = vadd.f32 %v1973, %v2021
    %v2023 = vpop.f32.mrf.mxu0
    %v2024 = vadd.f32 %v1975, %v2023
    %2025 = vmatmul.bf16.gmra.mxu0 %v1079
    %v2026 = vpop.f32.mrf.mxu0
    %v2027 = vadd.f32 %v1978, %v2026
    %v2028 = vpop.f32.mrf.mxu0
    %v2029 = vadd.f32 %v1980, %v2028
    %2030 = vmatmul.bf16.gmra.mxu0 %v1087
    %v2031 = vpop.f32.mrf.mxu0
    %v2032 = vadd.f32 %v1983, %v2031
    %v2033 = vpop.f32.mrf.mxu0
    %v2034 = vadd.f32 %v1985, %v2033
    %2035 = vmatmul.bf16.gmra.mxu0 %v1095
    %v2036 = vpop.f32.mrf.mxu0
    %v2037 = vadd.f32 %v1988, %v2036
    %v2038 = vpop.f32.mrf.mxu0
    %v2039 = vadd.f32 %v1990, %v2038
    %2040 = vmatmul.bf16.gmra.mxu0 %v1103
    %v2041 = vpop.f32.mrf.mxu0
    %v2042 = vadd.f32 %v1993, %v2041
    %v2043 = vpop.f32.mrf.mxu0
    %v2044 = vadd.f32 %v1995, %v2043
    %2045 = vmatmul.bf16.gmra.mxu0 %v1111
    %v2046 = vpop.f32.mrf.mxu0
    %v2047 = vadd.f32 %v1998, %v2046
    %v2048 = vpop.f32.mrf.mxu0
    %v2049 = vadd.f32 %v2000, %v2048
    %2050 = vmatmul.bf16.gmra.mxu0 %v1119
    %v2051 = vpop.f32.mrf.mxu0
    %v2052 = vadd.f32 %v2003, %v2051
    %v2053 = vpop.f32.mrf.mxu0
    %v2054 = vadd.f32 %v2005, %v2053
    %2055 = vdwg.mxu0
    %2056 = vmatpush.bf16.msra.mxu0 %v1689
    %2057 = vmatpush.bf16.msra.mxu0 %v1688
    %2058 = vmatpush.bf16.msra.mxu0 %v1687
    %2059 = vmatpush.bf16.msra.mxu0 %v1686
    %2060 = vmatpush.bf16.msra.mxu0 %v1685
    %2061 = vmatpush.bf16.msra.mxu0 %v1684
    %2062 = vmatpush.bf16.msra.mxu0 %v1683
    %2063 = vmatpush.bf16.msra.mxu0 %v1682
    %2064 = vmatmul.bf16.gmra.mxu0 %v1064
    %v2065 = vpop.f32.mrf.mxu0
    %v2066 = vadd.f32 %v2017, %v2065
    %v2067 = vpop.f32.mrf.mxu0
    %v2068 = vadd.f32 %v2019, %v2067
    %2069 = vmatmul.bf16.gmra.mxu0 %v1072
    %v2070 = vpop.f32.mrf.mxu0
    %v2071 = vadd.f32 %v2022, %v2070
    %v2072 = vpop.f32.mrf.mxu0
    %v2073 = vadd.f32 %v2024, %v2072
    %2074 = vmatmul.bf16.gmra.mxu0 %v1080
    %v2075 = vpop.f32.mrf.mxu0
    %v2076 = vadd.f32 %v2027, %v2075
    %v2077 = vpop.f32.mrf.mxu0
    %v2078 = vadd.f32 %v2029, %v2077
    %2079 = vmatmul.bf16.gmra.mxu0 %v1088
    %v2080 = vpop.f32.mrf.mxu0
    %v2081 = vadd.f32 %v2032, %v2080
    %v2082 = vpop.f32.mrf.mxu0
    %v2083 = vadd.f32 %v2034, %v2082
    %2084 = vmatmul.bf16.gmra.mxu0 %v1096
    %v2085 = vpop.f32.mrf.mxu0
    %v2086 = vadd.f32 %v2037, %v2085
    %v2087 = vpop.f32.mrf.mxu0
    %v2088 = vadd.f32 %v2039, %v2087
    %2089 = vmatmul.bf16.gmra.mxu0 %v1104
    %v2090 = vpop.f32.mrf.mxu0
    %v2091 = vadd.f32 %v2042, %v2090
    %v2092 = vpop.f32.mrf.mxu0
    %v2093 = vadd.f32 %v2044, %v2092
    %2094 = vmatmul.bf16.gmra.mxu0 %v1112
    %v2095 = vpop.f32.mrf.mxu0
    %v2096 = vadd.f32 %v2047, %v2095
    %v2097 = vpop.f32.mrf.mxu0
    %v2098 = vadd.f32 %v2049, %v2097
    %2099 = vmatmul.bf16.gmra.mxu0 %v1120
    %v2100 = vpop.f32.mrf.mxu0
    %v2101 = vadd.f32 %v2052, %v2100
    %v2102 = vpop.f32.mrf.mxu0
    %v2103 = vadd.f32 %v2054, %v2102
    %2104 = vdwg.mxu0
    %2105 = vmatpush.bf16.msra.mxu0 %v1697
    %2106 = vmatpush.bf16.msra.mxu0 %v1696
    %2107 = vmatpush.bf16.msra.mxu0 %v1695
    %2108 = vmatpush.bf16.msra.mxu0 %v1694
    %2109 = vmatpush.bf16.msra.mxu0 %v1693
    %2110 = vmatpush.bf16.msra.mxu0 %v1692
    %2111 = vmatpush.bf16.msra.mxu0 %v1691
    %2112 = vmatpush.bf16.msra.mxu0 %v1690
    %2113 = vmatmul.bf16.gmra.mxu0 %v1065
    %v2114 = vpop.f32.mrf.mxu0
    %v2115 = vadd.f32 %v2066, %v2114
    %v2116 = vpop.f32.mrf.mxu0
    %v2117 = vadd.f32 %v2068, %v2116
    %2118 = vmatmul.bf16.gmra.mxu0 %v1073
    %v2119 = vpop.f32.mrf.mxu0
    %v2120 = vadd.f32 %v2071, %v2119
    %v2121 = vpop.f32.mrf.mxu0
    %v2122 = vadd.f32 %v2073, %v2121
    %2123 = vmatmul.bf16.gmra.mxu0 %v1081
    %v2124 = vpop.f32.mrf.mxu0
    %v2125 = vadd.f32 %v2076, %v2124
    %v2126 = vpop.f32.mrf.mxu0
    %v2127 = vadd.f32 %v2078, %v2126
    %2128 = vmatmul.bf16.gmra.mxu0 %v1089
    %v2129 = vpop.f32.mrf.mxu0
    %v2130 = vadd.f32 %v2081, %v2129
    %v2131 = vpop.f32.mrf.mxu0
    %v2132 = vadd.f32 %v2083, %v2131
    %2133 = vmatmul.bf16.gmra.mxu0 %v1097
    %v2134 = vpop.f32.mrf.mxu0
    %v2135 = vadd.f32 %v2086, %v2134
    %v2136 = vpop.f32.mrf.mxu0
    %v2137 = vadd.f32 %v2088, %v2136
    %2138 = vmatmul.bf16.gmra.mxu0 %v1105
    %v2139 = vpop.f32.mrf.mxu0
    %v2140 = vadd.f32 %v2091, %v2139
    %v2141 = vpop.f32.mrf.mxu0
    %v2142 = vadd.f32 %v2093, %v2141
    %2143 = vmatmul.bf16.gmra.mxu0 %v1113
    %v2144 = vpop.f32.mrf.mxu0
    %v2145 = vadd.f32 %v2096, %v2144
    %v2146 = vpop.f32.mrf.mxu0
    %v2147 = vadd.f32 %v2098, %v2146
    %2148 = vmatmul.bf16.gmra.mxu0 %v1121
    %v2149 = vpop.f32.mrf.mxu0
    %v2150 = vadd.f32 %v2101, %v2149
    %v2151 = vpop.f32.mrf.mxu0
    %v2152 = vadd.f32 %v2103, %v2151
    %2153 = vdwg.mxu0
    %v2282 = vunpack.c.l.b16 %v1122
    %v2283 = vunpack.c.l.b16 %v1123
    %v2284 = vunpack.c.l.b16 %v1124
    %v2285 = vunpack.c.l.b16 %v1125
    %v2286 = vunpack.c.l.b16 %v1126
    %v2287 = vunpack.c.l.b16 %v1127
    %v2288 = vunpack.c.l.b16 %v1128
    %v2289 = vunpack.c.l.b16 %v1129
    %v2290 = vunpack.c.l.b16 %v1130
    %v2291 = vunpack.c.l.b16 %v1131
    %v2292 = vunpack.c.l.b16 %v1132
    %v2293 = vunpack.c.l.b16 %v1133
    %v2294 = vunpack.c.l.b16 %v1134
    %v2295 = vunpack.c.l.b16 %v1135
    %v2296 = vunpack.c.l.b16 %v1136
    %v2297 = vunpack.c.l.b16 %v1137
    %v2298 = vunpack.c.l.b16 %v1138
    %v2299 = vunpack.c.l.b16 %v1139
    %v2300 = vunpack.c.l.b16 %v1140
    %v2301 = vunpack.c.l.b16 %v1141
    %v2302 = vunpack.c.l.b16 %v1142
    %v2303 = vunpack.c.l.b16 %v1143
    %v2304 = vunpack.c.l.b16 %v1144
    %v2305 = vunpack.c.l.b16 %v1145
    %v2306 = vunpack.c.l.b16 %v1146
    %v2307 = vunpack.c.l.b16 %v1147
    %v2308 = vunpack.c.l.b16 %v1148
    %v2309 = vunpack.c.l.b16 %v1149
    %v2310 = vunpack.c.l.b16 %v1150
    %v2311 = vunpack.c.l.b16 %v1151
    %v2312 = vunpack.c.l.b16 %v1152
    %v2313 = vunpack.c.l.b16 %v1153
    %v2314 = vunpack.c.l.b16 %v1154
    %v2315 = vunpack.c.l.b16 %v1155
    %v2316 = vunpack.c.l.b16 %v1156
    %v2317 = vunpack.c.l.b16 %v1157
    %v2318 = vunpack.c.l.b16 %v1158
    %v2319 = vunpack.c.l.b16 %v1159
    %v2320 = vunpack.c.l.b16 %v1160
    %v2321 = vunpack.c.l.b16 %v1161
    %v2322 = vunpack.c.l.b16 %v1162
    %v2323 = vunpack.c.l.b16 %v1163
    %v2324 = vunpack.c.l.b16 %v1164
    %v2325 = vunpack.c.l.b16 %v1165
    %v2326 = vunpack.c.l.b16 %v1166
    %v2327 = vunpack.c.l.b16 %v1167
    %v2328 = vunpack.c.l.b16 %v1168
    %v2329 = vunpack.c.l.b16 %v1169
    %v2330 = vunpack.c.l.b16 %v1170
    %v2331 = vunpack.c.l.b16 %v1171
    %v2332 = vunpack.c.l.b16 %v1172
    %v2333 = vunpack.c.l.b16 %v1173
    %v2334 = vunpack.c.l.b16 %v1174
    %v2335 = vunpack.c.l.b16 %v1175
    %v2336 = vunpack.c.l.b16 %v1176
    %v2337 = vunpack.c.l.b16 %v1177
    %v2338 = vunpack.c.l.b16 %v1178
    %v2339 = vunpack.c.l.b16 %v1179
    %v2340 = vunpack.c.l.b16 %v1180
    %v2341 = vunpack.c.l.b16 %v1181
    %v2342 = vunpack.c.l.b16 %v1182
    %v2343 = vunpack.c.l.b16 %v1183
    %v2344 = vunpack.c.l.b16 %v1184
    %v2345 = vunpack.c.l.b16 %v1185
    %v2346 = vunpack.c.l.b16 %v1186
    %v2347 = vunpack.c.l.b16 %v1187
    %v2348 = vunpack.c.l.b16 %v1188
    %v2349 = vunpack.c.l.b16 %v1189
    %v2350 = vunpack.c.l.b16 %v1190
    %v2351 = vunpack.c.l.b16 %v1191
    %v2352 = vunpack.c.l.b16 %v1192
    %v2353 = vunpack.c.l.b16 %v1193
    %v2354 = vunpack.c.l.b16 %v1194
    %v2355 = vunpack.c.l.b16 %v1195
    %v2356 = vunpack.c.l.b16 %v1196
    %v2357 = vunpack.c.l.b16 %v1197
    %v2358 = vunpack.c.l.b16 %v1198
    %v2359 = vunpack.c.l.b16 %v1199
    %v2360 = vunpack.c.l.b16 %v1200
    %v2361 = vunpack.c.l.b16 %v1201
    %v2362 = vunpack.c.l.b16 %v1202
    %v2363 = vunpack.c.l.b16 %v1203
    %v2364 = vunpack.c.l.b16 %v1204
    %v2365 = vunpack.c.l.b16 %v1205
    %v2366 = vunpack.c.l.b16 %v1206
    %v2367 = vunpack.c.l.b16 %v1207
    %v2368 = vunpack.c.l.b16 %v1208
    %v2369 = vunpack.c.l.b16 %v1209
    %v2370 = vunpack.c.l.b16 %v1210
    %v2371 = vunpack.c.l.b16 %v1211
    %v2372 = vunpack.c.l.b16 %v1212
    %v2373 = vunpack.c.l.b16 %v1213
    %v2374 = vunpack.c.l.b16 %v1214
    %v2375 = vunpack.c.l.b16 %v1215
    %v2376 = vunpack.c.l.b16 %v1216
    %v2377 = vunpack.c.l.b16 %v1217
    %v2378 = vunpack.c.l.b16 %v1218
    %v2379 = vunpack.c.l.b16 %v1219
    %v2380 = vunpack.c.l.b16 %v1220
    %v2381 = vunpack.c.l.b16 %v1221
    %v2382 = vunpack.c.l.b16 %v1222
    %v2383 = vunpack.c.l.b16 %v1223
    %v2384 = vunpack.c.l.b16 %v1224
    %v2385 = vunpack.c.l.b16 %v1225
    %v2386 = vunpack.c.l.b16 %v1226
    %v2387 = vunpack.c.l.b16 %v1227
    %v2388 = vunpack.c.l.b16 %v1228
    %v2389 = vunpack.c.l.b16 %v1229
    %v2390 = vunpack.c.l.b16 %v1230
    %v2391 = vunpack.c.l.b16 %v1231
    %v2392 = vunpack.c.l.b16 %v1232
    %v2393 = vunpack.c.l.b16 %v1233
    %v2394 = vunpack.c.l.b16 %v1234
    %v2395 = vunpack.c.l.b16 %v1235
    %v2396 = vunpack.c.l.b16 %v1236
    %v2397 = vunpack.c.l.b16 %v1237
    %v2398 = vunpack.c.l.b16 %v1238
    %v2399 = vunpack.c.l.b16 %v1239
    %v2400 = vunpack.c.l.b16 %v1240
    %v2401 = vunpack.c.l.b16 %v1241
    %v2402 = vunpack.c.l.b16 %v1242
    %v2403 = vunpack.c.l.b16 %v1243
    %v2404 = vunpack.c.l.b16 %v1244
    %v2405 = vunpack.c.l.b16 %v1245
    %v2406 = vunpack.c.l.b16 %v1246
    %v2407 = vunpack.c.l.b16 %v1247
    %v2408 = vunpack.c.l.b16 %v1248
    %v2409 = vunpack.c.l.b16 %v1249
    %v2410 = vpack.c.b16 %v2283, %v2282
    %v2411 = vpack.c.b16 %v2285, %v2284
    %v2412 = vpack.c.b16 %v2287, %v2286
    %v2413 = vpack.c.b16 %v2289, %v2288
    %v2414 = vpack.c.b16 %v2291, %v2290
    %v2415 = vpack.c.b16 %v2293, %v2292
    %v2416 = vpack.c.b16 %v2295, %v2294
    %v2417 = vpack.c.b16 %v2297, %v2296
    %v2418 = vpack.c.b16 %v2299, %v2298
    %v2419 = vpack.c.b16 %v2301, %v2300
    %v2420 = vpack.c.b16 %v2303, %v2302
    %v2421 = vpack.c.b16 %v2305, %v2304
    %v2422 = vpack.c.b16 %v2307, %v2306
    %v2423 = vpack.c.b16 %v2309, %v2308
    %v2424 = vpack.c.b16 %v2311, %v2310
    %v2425 = vpack.c.b16 %v2313, %v2312
    %v2426 = vpack.c.b16 %v2315, %v2314
    %v2427 = vpack.c.b16 %v2317, %v2316
    %v2428 = vpack.c.b16 %v2319, %v2318
    %v2429 = vpack.c.b16 %v2321, %v2320
    %v2430 = vpack.c.b16 %v2323, %v2322
    %v2431 = vpack.c.b16 %v2325, %v2324
    %v2432 = vpack.c.b16 %v2327, %v2326
    %v2433 = vpack.c.b16 %v2329, %v2328
    %v2434 = vpack.c.b16 %v2331, %v2330
    %v2435 = vpack.c.b16 %v2333, %v2332
    %v2436 = vpack.c.b16 %v2335, %v2334
    %v2437 = vpack.c.b16 %v2337, %v2336
    %v2438 = vpack.c.b16 %v2339, %v2338
    %v2439 = vpack.c.b16 %v2341, %v2340
    %v2440 = vpack.c.b16 %v2343, %v2342
    %v2441 = vpack.c.b16 %v2345, %v2344
    %v2442 = vpack.c.b16 %v2347, %v2346
    %v2443 = vpack.c.b16 %v2349, %v2348
    %v2444 = vpack.c.b16 %v2351, %v2350
    %v2445 = vpack.c.b16 %v2353, %v2352
    %v2446 = vpack.c.b16 %v2355, %v2354
    %v2447 = vpack.c.b16 %v2357, %v2356
    %v2448 = vpack.c.b16 %v2359, %v2358
    %v2449 = vpack.c.b16 %v2361, %v2360
    %v2450 = vpack.c.b16 %v2363, %v2362
    %v2451 = vpack.c.b16 %v2365, %v2364
    %v2452 = vpack.c.b16 %v2367, %v2366
    %v2453 = vpack.c.b16 %v2369, %v2368
    %v2454 = vpack.c.b16 %v2371, %v2370
    %v2455 = vpack.c.b16 %v2373, %v2372
    %v2456 = vpack.c.b16 %v2375, %v2374
    %v2457 = vpack.c.b16 %v2377, %v2376
    %v2458 = vpack.c.b16 %v2379, %v2378
    %v2459 = vpack.c.b16 %v2381, %v2380
    %v2460 = vpack.c.b16 %v2383, %v2382
    %v2461 = vpack.c.b16 %v2385, %v2384
    %v2462 = vpack.c.b16 %v2387, %v2386
    %v2463 = vpack.c.b16 %v2389, %v2388
    %v2464 = vpack.c.b16 %v2391, %v2390
    %v2465 = vpack.c.b16 %v2393, %v2392
    %v2466 = vpack.c.b16 %v2395, %v2394
    %v2467 = vpack.c.b16 %v2397, %v2396
    %v2468 = vpack.c.b16 %v2399, %v2398
    %v2469 = vpack.c.b16 %v2401, %v2400
    %v2470 = vpack.c.b16 %v2403, %v2402
    %v2471 = vpack.c.b16 %v2405, %v2404
    %v2472 = vpack.c.b16 %v2407, %v2406
    %v2473 = vpack.c.b16 %v2409, %v2408
    %2538 = vmatpush.bf16.msra.mxu0 %v2417
    %2539 = vmatpush.bf16.msra.mxu0 %v2416
    %2540 = vmatpush.bf16.msra.mxu0 %v2415
    %2541 = vmatpush.bf16.msra.mxu0 %v2414
    %2542 = vmatpush.bf16.msra.mxu0 %v2413
    %2543 = vmatpush.bf16.msra.mxu0 %v2412
    %2544 = vmatpush.bf16.msra.mxu0 %v2411
    %2545 = vmatpush.bf16.msra.mxu0 %v2410
    %2546 = vmatmul.bf16.gmra.mxu0 %v1058
    %v2547 = vpop.f32.mrf.mxu0
    %v2548 = vadd.f32 %v2115, %v2547
    %v2549 = vpop.f32.mrf.mxu0
    %v2550 = vadd.f32 %v2117, %v2549
    %2551 = vmatmul.bf16.gmra.mxu0 %v1066
    %v2552 = vpop.f32.mrf.mxu0
    %v2553 = vadd.f32 %v2120, %v2552
    %v2554 = vpop.f32.mrf.mxu0
    %v2555 = vadd.f32 %v2122, %v2554
    %2556 = vmatmul.bf16.gmra.mxu0 %v1074
    %v2557 = vpop.f32.mrf.mxu0
    %v2558 = vadd.f32 %v2125, %v2557
    %v2559 = vpop.f32.mrf.mxu0
    %v2560 = vadd.f32 %v2127, %v2559
    %2561 = vmatmul.bf16.gmra.mxu0 %v1082
    %v2562 = vpop.f32.mrf.mxu0
    %v2563 = vadd.f32 %v2130, %v2562
    %v2564 = vpop.f32.mrf.mxu0
    %v2565 = vadd.f32 %v2132, %v2564
    %2566 = vmatmul.bf16.gmra.mxu0 %v1090
    %v2567 = vpop.f32.mrf.mxu0
    %v2568 = vadd.f32 %v2135, %v2567
    %v2569 = vpop.f32.mrf.mxu0
    %v2570 = vadd.f32 %v2137, %v2569
    %2571 = vmatmul.bf16.gmra.mxu0 %v1098
    %v2572 = vpop.f32.mrf.mxu0
    %v2573 = vadd.f32 %v2140, %v2572
    %v2574 = vpop.f32.mrf.mxu0
    %v2575 = vadd.f32 %v2142, %v2574
    %2576 = vmatmul.bf16.gmra.mxu0 %v1106
    %v2577 = vpop.f32.mrf.mxu0
    %v2578 = vadd.f32 %v2145, %v2577
    %v2579 = vpop.f32.mrf.mxu0
    %v2580 = vadd.f32 %v2147, %v2579
    %2581 = vmatmul.bf16.gmra.mxu0 %v1114
    %v2582 = vpop.f32.mrf.mxu0
    %v2583 = vadd.f32 %v2150, %v2582
    %v2584 = vpop.f32.mrf.mxu0
    %v2585 = vadd.f32 %v2152, %v2584
    %2586 = vdwg.mxu0
    %2587 = vmatpush.bf16.msra.mxu0 %v2425
    %2588 = vmatpush.bf16.msra.mxu0 %v2424
    %2589 = vmatpush.bf16.msra.mxu0 %v2423
    %2590 = vmatpush.bf16.msra.mxu0 %v2422
    %2591 = vmatpush.bf16.msra.mxu0 %v2421
    %2592 = vmatpush.bf16.msra.mxu0 %v2420
    %2593 = vmatpush.bf16.msra.mxu0 %v2419
    %2594 = vmatpush.bf16.msra.mxu0 %v2418
    %2595 = vmatmul.bf16.gmra.mxu0 %v1059
    %v2596 = vpop.f32.mrf.mxu0
    %v2597 = vadd.f32 %v2548, %v2596
    %v2598 = vpop.f32.mrf.mxu0
    %v2599 = vadd.f32 %v2550, %v2598
    %2600 = vmatmul.bf16.gmra.mxu0 %v1067
    %v2601 = vpop.f32.mrf.mxu0
    %v2602 = vadd.f32 %v2553, %v2601
    %v2603 = vpop.f32.mrf.mxu0
    %v2604 = vadd.f32 %v2555, %v2603
    %2605 = vmatmul.bf16.gmra.mxu0 %v1075
    %v2606 = vpop.f32.mrf.mxu0
    %v2607 = vadd.f32 %v2558, %v2606
    %v2608 = vpop.f32.mrf.mxu0
    %v2609 = vadd.f32 %v2560, %v2608
    %2610 = vmatmul.bf16.gmra.mxu0 %v1083
    %v2611 = vpop.f32.mrf.mxu0
    %v2612 = vadd.f32 %v2563, %v2611
    %v2613 = vpop.f32.mrf.mxu0
    %v2614 = vadd.f32 %v2565, %v2613
    %2615 = vmatmul.bf16.gmra.mxu0 %v1091
    %v2616 = vpop.f32.mrf.mxu0
    %v2617 = vadd.f32 %v2568, %v2616
    %v2618 = vpop.f32.mrf.mxu0
    %v2619 = vadd.f32 %v2570, %v2618
    %2620 = vmatmul.bf16.gmra.mxu0 %v1099
    %v2621 = vpop.f32.mrf.mxu0
    %v2622 = vadd.f32 %v2573, %v2621
    %v2623 = vpop.f32.mrf.mxu0
    %v2624 = vadd.f32 %v2575, %v2623
    %2625 = vmatmul.bf16.gmra.mxu0 %v1107
    %v2626 = vpop.f32.mrf.mxu0
    %v2627 = vadd.f32 %v2578, %v2626
    %v2628 = vpop.f32.mrf.mxu0
    %v2629 = vadd.f32 %v2580, %v2628
    %2630 = vmatmul.bf16.gmra.mxu0 %v1115
    %v2631 = vpop.f32.mrf.mxu0
    %v2632 = vadd.f32 %v2583, %v2631
    %v2633 = vpop.f32.mrf.mxu0
    %v2634 = vadd.f32 %v2585, %v2633
    %2635 = vdwg.mxu0
    %2636 = vmatpush.bf16.msra.mxu0 %v2433
    %2637 = vmatpush.bf16.msra.mxu0 %v2432
    %2638 = vmatpush.bf16.msra.mxu0 %v2431
    %2639 = vmatpush.bf16.msra.mxu0 %v2430
    %2640 = vmatpush.bf16.msra.mxu0 %v2429
    %2641 = vmatpush.bf16.msra.mxu0 %v2428
    %2642 = vmatpush.bf16.msra.mxu0 %v2427
    %2643 = vmatpush.bf16.msra.mxu0 %v2426
    %2644 = vmatmul.bf16.gmra.mxu0 %v1060
    %v2645 = vpop.f32.mrf.mxu0
    %v2646 = vadd.f32 %v2597, %v2645
    %v2647 = vpop.f32.mrf.mxu0
    %v2648 = vadd.f32 %v2599, %v2647
    %2649 = vmatmul.bf16.gmra.mxu0 %v1068
    %v2650 = vpop.f32.mrf.mxu0
    %v2651 = vadd.f32 %v2602, %v2650
    %v2652 = vpop.f32.mrf.mxu0
    %v2653 = vadd.f32 %v2604, %v2652
    %2654 = vmatmul.bf16.gmra.mxu0 %v1076
    %v2655 = vpop.f32.mrf.mxu0
    %v2656 = vadd.f32 %v2607, %v2655
    %v2657 = vpop.f32.mrf.mxu0
    %v2658 = vadd.f32 %v2609, %v2657
    %2659 = vmatmul.bf16.gmra.mxu0 %v1084
    %v2660 = vpop.f32.mrf.mxu0
    %v2661 = vadd.f32 %v2612, %v2660
    %v2662 = vpop.f32.mrf.mxu0
    %v2663 = vadd.f32 %v2614, %v2662
    %2664 = vmatmul.bf16.gmra.mxu0 %v1092
    %v2665 = vpop.f32.mrf.mxu0
    %v2666 = vadd.f32 %v2617, %v2665
    %v2667 = vpop.f32.mrf.mxu0
    %v2668 = vadd.f32 %v2619, %v2667
    %2669 = vmatmul.bf16.gmra.mxu0 %v1100
    %v2670 = vpop.f32.mrf.mxu0
    %v2671 = vadd.f32 %v2622, %v2670
    %v2672 = vpop.f32.mrf.mxu0
    %v2673 = vadd.f32 %v2624, %v2672
    %2674 = vmatmul.bf16.gmra.mxu0 %v1108
    %v2675 = vpop.f32.mrf.mxu0
    %v2676 = vadd.f32 %v2627, %v2675
    %v2677 = vpop.f32.mrf.mxu0
    %v2678 = vadd.f32 %v2629, %v2677
    %2679 = vmatmul.bf16.gmra.mxu0 %v1116
    %v2680 = vpop.f32.mrf.mxu0
    %v2681 = vadd.f32 %v2632, %v2680
    %v2682 = vpop.f32.mrf.mxu0
    %v2683 = vadd.f32 %v2634, %v2682
    %2684 = vdwg.mxu0
    %2685 = vmatpush.bf16.msra.mxu0 %v2441
    %2686 = vmatpush.bf16.msra.mxu0 %v2440
    %2687 = vmatpush.bf16.msra.mxu0 %v2439
    %2688 = vmatpush.bf16.msra.mxu0 %v2438
    %2689 = vmatpush.bf16.msra.mxu0 %v2437
    %2690 = vmatpush.bf16.msra.mxu0 %v2436
    %2691 = vmatpush.bf16.msra.mxu0 %v2435
    %2692 = vmatpush.bf16.msra.mxu0 %v2434
    %2693 = vmatmul.bf16.gmra.mxu0 %v1061
    %v2694 = vpop.f32.mrf.mxu0
    %v2695 = vadd.f32 %v2646, %v2694
    %v2696 = vpop.f32.mrf.mxu0
    %v2697 = vadd.f32 %v2648, %v2696
    %2698 = vmatmul.bf16.gmra.mxu0 %v1069
    %v2699 = vpop.f32.mrf.mxu0
    %v2700 = vadd.f32 %v2651, %v2699
    %v2701 = vpop.f32.mrf.mxu0
    %v2702 = vadd.f32 %v2653, %v2701
    %2703 = vmatmul.bf16.gmra.mxu0 %v1077
    %v2704 = vpop.f32.mrf.mxu0
    %v2705 = vadd.f32 %v2656, %v2704
    %v2706 = vpop.f32.mrf.mxu0
    %v2707 = vadd.f32 %v2658, %v2706
    %2708 = vmatmul.bf16.gmra.mxu0 %v1085
    %v2709 = vpop.f32.mrf.mxu0
    %v2710 = vadd.f32 %v2661, %v2709
    %v2711 = vpop.f32.mrf.mxu0
    %v2712 = vadd.f32 %v2663, %v2711
    %2713 = vmatmul.bf16.gmra.mxu0 %v1093
    %v2714 = vpop.f32.mrf.mxu0
    %v2715 = vadd.f32 %v2666, %v2714
    %v2716 = vpop.f32.mrf.mxu0
    %v2717 = vadd.f32 %v2668, %v2716
    %2718 = vmatmul.bf16.gmra.mxu0 %v1101
    %v2719 = vpop.f32.mrf.mxu0
    %v2720 = vadd.f32 %v2671, %v2719
    %v2721 = vpop.f32.mrf.mxu0
    %v2722 = vadd.f32 %v2673, %v2721
    %2723 = vmatmul.bf16.gmra.mxu0 %v1109
    %v2724 = vpop.f32.mrf.mxu0
    %v2725 = vadd.f32 %v2676, %v2724
    %v2726 = vpop.f32.mrf.mxu0
    %v2727 = vadd.f32 %v2678, %v2726
    %2728 = vmatmul.bf16.gmra.mxu0 %v1117
    %v2729 = vpop.f32.mrf.mxu0
    %v2730 = vadd.f32 %v2681, %v2729
    %v2731 = vpop.f32.mrf.mxu0
    %v2732 = vadd.f32 %v2683, %v2731
    %2733 = vdwg.mxu0
    %2734 = vmatpush.bf16.msra.mxu0 %v2449
    %2735 = vmatpush.bf16.msra.mxu0 %v2448
    %2736 = vmatpush.bf16.msra.mxu0 %v2447
    %2737 = vmatpush.bf16.msra.mxu0 %v2446
    %2738 = vmatpush.bf16.msra.mxu0 %v2445
    %2739 = vmatpush.bf16.msra.mxu0 %v2444
    %2740 = vmatpush.bf16.msra.mxu0 %v2443
    %2741 = vmatpush.bf16.msra.mxu0 %v2442
    %2742 = vmatmul.bf16.gmra.mxu0 %v1062
    %v2743 = vpop.f32.mrf.mxu0
    %v2744 = vadd.f32 %v2695, %v2743
    %v2745 = vpop.f32.mrf.mxu0
    %v2746 = vadd.f32 %v2697, %v2745
    %2747 = vmatmul.bf16.gmra.mxu0 %v1070
    %v2748 = vpop.f32.mrf.mxu0
    %v2749 = vadd.f32 %v2700, %v2748
    %v2750 = vpop.f32.mrf.mxu0
    %v2751 = vadd.f32 %v2702, %v2750
    %2752 = vmatmul.bf16.gmra.mxu0 %v1078
    %v2753 = vpop.f32.mrf.mxu0
    %v2754 = vadd.f32 %v2705, %v2753
    %v2755 = vpop.f32.mrf.mxu0
    %v2756 = vadd.f32 %v2707, %v2755
    %2757 = vmatmul.bf16.gmra.mxu0 %v1086
    %v2758 = vpop.f32.mrf.mxu0
    %v2759 = vadd.f32 %v2710, %v2758
    %v2760 = vpop.f32.mrf.mxu0
    %v2761 = vadd.f32 %v2712, %v2760
    %2762 = vmatmul.bf16.gmra.mxu0 %v1094
    %v2763 = vpop.f32.mrf.mxu0
    %v2764 = vadd.f32 %v2715, %v2763
    %v2765 = vpop.f32.mrf.mxu0
    %v2766 = vadd.f32 %v2717, %v2765
    %2767 = vmatmul.bf16.gmra.mxu0 %v1102
    %v2768 = vpop.f32.mrf.mxu0
    %v2769 = vadd.f32 %v2720, %v2768
    %v2770 = vpop.f32.mrf.mxu0
    %v2771 = vadd.f32 %v2722, %v2770
    %2772 = vmatmul.bf16.gmra.mxu0 %v1110
    %v2773 = vpop.f32.mrf.mxu0
    %v2774 = vadd.f32 %v2725, %v2773
    %v2775 = vpop.f32.mrf.mxu0
    %v2776 = vadd.f32 %v2727, %v2775
    %2777 = vmatmul.bf16.gmra.mxu0 %v1118
    %v2778 = vpop.f32.mrf.mxu0
    %v2779 = vadd.f32 %v2730, %v2778
    %v2780 = vpop.f32.mrf.mxu0
    %v2781 = vadd.f32 %v2732, %v2780
    %2782 = vdwg.mxu0
    %2783 = vmatpush.bf16.msra.mxu0 %v2457
    %2784 = vmatpush.bf16.msra.mxu0 %v2456
    %2785 = vmatpush.bf16.msra.mxu0 %v2455
    %2786 = vmatpush.bf16.msra.mxu0 %v2454
    %2787 = vmatpush.bf16.msra.mxu0 %v2453
    %2788 = vmatpush.bf16.msra.mxu0 %v2452
    %2789 = vmatpush.bf16.msra.mxu0 %v2451
    %2790 = vmatpush.bf16.msra.mxu0 %v2450
    %2791 = vmatmul.bf16.gmra.mxu0 %v1063
    %v2792 = vpop.f32.mrf.mxu0
    %v2793 = vadd.f32 %v2744, %v2792
    %v2794 = vpop.f32.mrf.mxu0
    %v2795 = vadd.f32 %v2746, %v2794
    %2796 = vmatmul.bf16.gmra.mxu0 %v1071
    %v2797 = vpop.f32.mrf.mxu0
    %v2798 = vadd.f32 %v2749, %v2797
    %v2799 = vpop.f32.mrf.mxu0
    %v2800 = vadd.f32 %v2751, %v2799
    %2801 = vmatmul.bf16.gmra.mxu0 %v1079
    %v2802 = vpop.f32.mrf.mxu0
    %v2803 = vadd.f32 %v2754, %v2802
    %v2804 = vpop.f32.mrf.mxu0
    %v2805 = vadd.f32 %v2756, %v2804
    %2806 = vmatmul.bf16.gmra.mxu0 %v1087
    %v2807 = vpop.f32.mrf.mxu0
    %v2808 = vadd.f32 %v2759, %v2807
    %v2809 = vpop.f32.mrf.mxu0
    %v2810 = vadd.f32 %v2761, %v2809
    %2811 = vmatmul.bf16.gmra.mxu0 %v1095
    %v2812 = vpop.f32.mrf.mxu0
    %v2813 = vadd.f32 %v2764, %v2812
    %v2814 = vpop.f32.mrf.mxu0
    %v2815 = vadd.f32 %v2766, %v2814
    %2816 = vmatmul.bf16.gmra.mxu0 %v1103
    %v2817 = vpop.f32.mrf.mxu0
    %v2818 = vadd.f32 %v2769, %v2817
    %v2819 = vpop.f32.mrf.mxu0
    %v2820 = vadd.f32 %v2771, %v2819
    %2821 = vmatmul.bf16.gmra.mxu0 %v1111
    %v2822 = vpop.f32.mrf.mxu0
    %v2823 = vadd.f32 %v2774, %v2822
    %v2824 = vpop.f32.mrf.mxu0
    %v2825 = vadd.f32 %v2776, %v2824
    %2826 = vmatmul.bf16.gmra.mxu0 %v1119
    %v2827 = vpop.f32.mrf.mxu0
    %v2828 = vadd.f32 %v2779, %v2827
    %v2829 = vpop.f32.mrf.mxu0
    %v2830 = vadd.f32 %v2781, %v2829
    %2831 = vdwg.mxu0
    %2832 = vmatpush.bf16.msra.mxu0 %v2465
    %2833 = vmatpush.bf16.msra.mxu0 %v2464
    %2834 = vmatpush.bf16.msra.mxu0 %v2463
    %2835 = vmatpush.bf16.msra.mxu0 %v2462
    %2836 = vmatpush.bf16.msra.mxu0 %v2461
    %2837 = vmatpush.bf16.msra.mxu0 %v2460
    %2838 = vmatpush.bf16.msra.mxu0 %v2459
    %2839 = vmatpush.bf16.msra.mxu0 %v2458
    %2840 = vmatmul.bf16.gmra.mxu0 %v1064
    %v2841 = vpop.f32.mrf.mxu0
    %v2842 = vadd.f32 %v2793, %v2841
    %v2843 = vpop.f32.mrf.mxu0
    %v2844 = vadd.f32 %v2795, %v2843
    %2845 = vmatmul.bf16.gmra.mxu0 %v1072
    %v2846 = vpop.f32.mrf.mxu0
    %v2847 = vadd.f32 %v2798, %v2846
    %v2848 = vpop.f32.mrf.mxu0
    %v2849 = vadd.f32 %v2800, %v2848
    %2850 = vmatmul.bf16.gmra.mxu0 %v1080
    %v2851 = vpop.f32.mrf.mxu0
    %v2852 = vadd.f32 %v2803, %v2851
    %v2853 = vpop.f32.mrf.mxu0
    %v2854 = vadd.f32 %v2805, %v2853
    %2855 = vmatmul.bf16.gmra.mxu0 %v1088
    %v2856 = vpop.f32.mrf.mxu0
    %v2857 = vadd.f32 %v2808, %v2856
    %v2858 = vpop.f32.mrf.mxu0
    %v2859 = vadd.f32 %v2810, %v2858
    %2860 = vmatmul.bf16.gmra.mxu0 %v1096
    %v2861 = vpop.f32.mrf.mxu0
    %v2862 = vadd.f32 %v2813, %v2861
    %v2863 = vpop.f32.mrf.mxu0
    %v2864 = vadd.f32 %v2815, %v2863
    %2865 = vmatmul.bf16.gmra.mxu0 %v1104
    %v2866 = vpop.f32.mrf.mxu0
    %v2867 = vadd.f32 %v2818, %v2866
    %v2868 = vpop.f32.mrf.mxu0
    %v2869 = vadd.f32 %v2820, %v2868
    %2870 = vmatmul.bf16.gmra.mxu0 %v1112
    %v2871 = vpop.f32.mrf.mxu0
    %v2872 = vadd.f32 %v2823, %v2871
    %v2873 = vpop.f32.mrf.mxu0
    %v2874 = vadd.f32 %v2825, %v2873
    %2875 = vmatmul.bf16.gmra.mxu0 %v1120
    %v2876 = vpop.f32.mrf.mxu0
    %v2877 = vadd.f32 %v2828, %v2876
    %v2878 = vpop.f32.mrf.mxu0
    %v2879 = vadd.f32 %v2830, %v2878
    %2880 = vdwg.mxu0
    %2881 = vmatpush.bf16.msra.mxu0 %v2473
    %2882 = vmatpush.bf16.msra.mxu0 %v2472
    %2883 = vmatpush.bf16.msra.mxu0 %v2471
    %2884 = vmatpush.bf16.msra.mxu0 %v2470
    %2885 = vmatpush.bf16.msra.mxu0 %v2469
    %2886 = vmatpush.bf16.msra.mxu0 %v2468
    %2887 = vmatpush.bf16.msra.mxu0 %v2467
    %2888 = vmatpush.bf16.msra.mxu0 %v2466
    %2889 = vmatmul.bf16.gmra.mxu0 %v1065
    %v2890 = vpop.f32.mrf.mxu0
    %v2891 = vadd.f32 %v2842, %v2890
    %v2892 = vpop.f32.mrf.mxu0
    %v2893 = vadd.f32 %v2844, %v2892
    %2894 = vmatmul.bf16.gmra.mxu0 %v1073
    %v2895 = vpop.f32.mrf.mxu0
    %v2896 = vadd.f32 %v2847, %v2895
    %v2897 = vpop.f32.mrf.mxu0
    %v2898 = vadd.f32 %v2849, %v2897
    %2899 = vmatmul.bf16.gmra.mxu0 %v1081
    %v2900 = vpop.f32.mrf.mxu0
    %v2901 = vadd.f32 %v2852, %v2900
    %v2902 = vpop.f32.mrf.mxu0
    %v2903 = vadd.f32 %v2854, %v2902
    %2904 = vmatmul.bf16.gmra.mxu0 %v1089
    %v2905 = vpop.f32.mrf.mxu0
    %v2906 = vadd.f32 %v2857, %v2905
    %v2907 = vpop.f32.mrf.mxu0
    %v2908 = vadd.f32 %v2859, %v2907
    %2909 = vmatmul.bf16.gmra.mxu0 %v1097
    %v2910 = vpop.f32.mrf.mxu0
    %v2911 = vadd.f32 %v2862, %v2910
    %v2912 = vpop.f32.mrf.mxu0
    %v2913 = vadd.f32 %v2864, %v2912
    %2914 = vmatmul.bf16.gmra.mxu0 %v1105
    %v2915 = vpop.f32.mrf.mxu0
    %v2916 = vadd.f32 %v2867, %v2915
    %v2917 = vpop.f32.mrf.mxu0
    %v2918 = vadd.f32 %v2869, %v2917
    %2919 = vmatmul.bf16.gmra.mxu0 %v1113
    %v2920 = vpop.f32.mrf.mxu0
    %v2921 = vadd.f32 %v2872, %v2920
    %v2922 = vpop.f32.mrf.mxu0
    %v2923 = vadd.f32 %v2874, %v2922
    %2924 = vmatmul.bf16.gmra.mxu0 %v1121
    %v2925 = vpop.f32.mrf.mxu0
    %v2926 = vadd.f32 %v2877, %v2925
    %v2927 = vpop.f32.mrf.mxu0
    %v2928 = vadd.f32 %v2879, %v2927
    %2929 = vdwg.mxu0
    %2930 = vst [vmem:[#allocation7] sm:$0xff] %v2891
    %2931 = vst [vmem:[#allocation7 + $0x8] sm:$0xff] %v2893
    %2932 = vst [vmem:[#allocation7 + $0x10] sm:$0xff] %v2896
    %2933 = vst [vmem:[#allocation7 + $0x18] sm:$0xff] %v2898
    %2934 = vst [vmem:[#allocation7 + $0x20] sm:$0xff] %v2901
    %2935 = vst [vmem:[#allocation7 + $0x28] sm:$0xff] %v2903
    %2936 = vst [vmem:[#allocation7 + $0x30] sm:$0xff] %v2906
    %2937 = vst [vmem:[#allocation7 + $0x38] sm:$0xff] %v2908
    %2938 = vst [vmem:[#allocation7 + $0x40] sm:$0xff] %v2911
    %2939 = vst [vmem:[#allocation7 + $0x48] sm:$0xff] %v2913
    %2940 = vst [vmem:[#allocation7 + $0x50] sm:$0xff] %v2916
    %2941 = vst [vmem:[#allocation7 + $0x58] sm:$0xff] %v2918
    %2942 = vst [vmem:[#allocation7 + $0x60] sm:$0xff] %v2921
    %2943 = vst [vmem:[#allocation7 + $0x68] sm:$0xff] %v2923
    %2944 = vst [vmem:[#allocation7 + $0x70] sm:$0xff] %v2926
    %2945 = vst [vmem:[#allocation7 + $0x78] sm:$0xff] %v2928
    // Predicated region
    $region30: #{tpu_custom_call.1} parent=1 // pred_check
      _
    $region31: #{tpu_custom_call.1} parent=1 // pred_check_branch
      %2947 = sbr.rel (0) target = $region33
    $region32: #{tpu_custom_call.1} parent=1 // pred_region
      %2949 = vsyncadd [#allocation4], 0
      %s2950 = sshll.u32 [#allocation7], 4
      %s2951 = int_to_ptr.vmem [resolvable:$true] %s2950
      %s2952 = sshll.u32 %s5, 4
      %s2953 = int_to_ptr.hbm [resolvable:$true] %s2952
      %2958 = dma.vmem_to_hbm [thread:$0]  %s2951, 2048, %s2953, [#allocation4], 128, 128, 8
    $region33: #{tpu_custom_call.1} parent=1 // pred_fallthru
      _
    // Predicated region
    $region34: #{tpu_custom_call.1} parent=1 // pred_check
      _
    $region35: #{tpu_custom_call.1} parent=1 // pred_check_branch
      %2960 = sbr.rel (0) target = $region37
    $region36: #{tpu_custom_call.1} parent=1 // pred_region
      %2962 = dma.done [#allocation4], 2048
    $region37: #{tpu_custom_call.1} parent=1 // pred_fallthru
      _
    %2963 = vsyncpa [#allocation3], 1
    %2964 = vsyncpa [#allocation6], 1
    %2965 = vsyncpa [#allocation4], 1

</llo_original>
